<compile_context>
chip_gen: v5e
topology: v5e:2x2
jax: 0.10.0
libtpu: 0.0.40
codegen_flags: <defaults>
</compile_context>

<pallas_src>
import functools

import jax
import jax.numpy as jnp
from jax import lax
from jax.experimental import pallas as pl
from jax.experimental.pallas import tpu as pltpu  # noqa: F401  (TPU backend)

# ----------------------------- "opts" constants ------------------------------
NUM_AGENTS = 2                     # must divide 16
NFILTERD = 4
DIM = NFILTERD * 16                # 64
NFILTERD_TEMP = 4
CONV3D_DIM = NFILTERD_TEMP * 16    # 64
LATENT_Z = 32
ACTION_SPACE = 6
SEQ = 8
BATCH = 2
TEMPORAL_WINDOW = 8                # config_temporal < 12 -> only conv3d[0] path
WARM_UP = 1
A2F_OUT = NFILTERD * (16 // NUM_AGENTS)           # 32
TEMPORAL_C_IN = NUM_AGENTS * A2F_OUT + DIM        # 128
KTAP = 4                                          # temporal conv kernel (f_size)
TSTRIDE = 2
T_OUT = (SEQ - KTAP) // TSTRIDE + 1               # 3

LRELU_SLOPE = 0.2
BN_EPS = 1e-5

SB = SEQ * BATCH                                  # 16 frame rows
N_VALID = WARM_UP * BATCH + SB                    # 18 rows seen by BatchNorm
N_PAD = 24                                        # sublane-aligned row count
REC_COLS = NUM_AGENTS * ACTION_SPACE              # 12

# Output-slab column layout (lane-dense, 128 columns total).
SLAB_COLS = 128
COL_PRED = DIM                                    # column 64
COL_REC0 = DIM + 1                                # columns 65..76
COL_REC1 = DIM + 1 + REC_COLS                     # 77 (exclusive)
COL_TMP = DIM + 1 + REC_COLS                      # column 77
COL_TAIL = SLAB_COLS - (DIM + 1 + REC_COLS + 1)   # 50 zero columns


# --------------------------------- kernel ------------------------------------
def fused_disc_kernel(ds_in_ref, actions_ref,
                      w0_ref, b0_ref, wmid_ref, bmid_ref, wfin_ref, bfin_ref,
                      gamma_ref, beta_ref,
                      trans_w_ref, trans_b_ref,
                      a2f_w_ref, a2f_b_ref,
                      rec_w_ref, rec_b_ref,
                      t_w1_ref, t_b1_ref, t_wf_ref, t_bf_ref,
                      out_ref):
    f32 = jnp.float32

    def lrelu(v):
        return jnp.where(v >= 0, v, LRELU_SLOPE * v)

    gamma = gamma_ref[...]
    beta = beta_ref[...]

    # Mask out the padded rows from the BatchNorm batch statistics.
    row_mask = (lax.broadcasted_iota(jnp.int32, (N_PAD, 1), 0)
                < N_VALID).astype(f32)
    inv_n = 1.0 / N_VALID

    def bn_lrelu(h, layer):
        hm = h * row_mask
        mean = jnp.sum(hm, axis=0, keepdims=True) * inv_n
        ex2 = jnp.sum(hm * h, axis=0, keepdims=True) * inv_n   # E[h^2] (masked)
        var = ex2 - mean * mean                                # biased (training BN)
        hn = (h - mean) * lax.rsqrt(var + BN_EPS)
        hn = hn * gamma[layer:layer + 1, :] + beta[layer:layer + 1, :]
        return lrelu(hn)

    # ---- DiscriminatorSingleLatent: base (4x [SNLinear+BN+LReLU]) + d_final --
    x = ds_in_ref[...]                                          # (N_PAD, LATENT_Z)
    wmid = wmid_ref[...]                                        # (4, DIM, DIM)
    bmid = bmid_ref[...]                                        # (4, DIM)

    h = jnp.dot(x, w0_ref[...], preferred_element_type=f32) + b0_ref[...]
    h = bn_lrelu(h, 0)
    for i in range(3):
        h = jnp.dot(h, wmid[i], preferred_element_type=f32) + bmid[i:i + 1, :]
        h = bn_lrelu(h, 1 + i)
    h_all = h                                                   # base(x) features

    g = jnp.dot(h_all, wmid[3], preferred_element_type=f32) + bmid[3:4, :]
    g = bn_lrelu(g, 4)
    # 1-column head as a lane reduction (avoids a 1-wide MXU matmul).
    pred_all = jnp.sum(g * wfin_ref[...], axis=-1, keepdims=True) + bfin_ref[...]

    # ---- to_transition_feature ------------------------------------------------
    wb = WARM_UP * BATCH
    # input_detach => stop_gradient in torch; forward-only here, so a no-op.
    prev_frames = jnp.concatenate(
        [h_all[:wb], h_all[(2 * WARM_UP - 1) * BATCH:N_VALID - BATCH]], axis=0)
    next_features = h_all[wb:wb + SB]
    trans_in = jnp.concatenate([prev_frames, next_features], axis=1)   # (SB, 2*DIM)
    tf = lrelu(jnp.dot(trans_in, trans_w_ref[...],
                       preferred_element_type=f32) + trans_b_ref[...])  # (SB, DIM)

    # ---- per-agent linears collapsed into packed matmuls ----------------------
    # actions_ref: (SB, NUM_AGENTS*ACTION_SPACE); a2f weight is block-diagonal,
    # so the result columns are [agent0 feats | agent1 feats], matching torch.
    action_feats = (jnp.dot(actions_ref[...], a2f_w_ref[...],
                            preferred_element_type=f32) + a2f_b_ref[...])
    recons = (jnp.dot(tf, rec_w_ref[...],
                      preferred_element_type=f32) + rec_b_ref[...])     # (SB, 12)

    # ---- temporal discriminator (synthetic head) ------------------------------
    # TODO(synk): model_utils.choose_netD_temporal_m is not provided; this is a
    #             synthetic 2-stage temporal conv (K=4, stride=2 -> 1 logit).
    # stacked row r corresponds to (s = r // BATCH, b = r % BATCH).
    stacked = jnp.concatenate([action_feats, tf], axis=1)       # (SB, TEMPORAL_C_IN)
    # im2col: one (B*T_OUT, KTAP*C) @ (KTAP*C, D) matmul instead of K*T_OUT tiny ones.
    rows = []
    for b in range(BATCH):
        for t in range(T_OUT):
            taps = [stacked[(TSTRIDE * t + k) * BATCH + b:
                            (TSTRIDE * t + k) * BATCH + b + 1, :]
                    for k in range(KTAP)]
            rows.append(jnp.concatenate(taps, axis=1))          # (1, KTAP*C)
    lhs = jnp.concatenate(rows, axis=0)                         # (B*T_OUT, KTAP*C)
    ht = lrelu(jnp.dot(lhs, t_w1_ref[...],
                       preferred_element_type=f32) + t_b1_ref[...])   # (B*T_OUT, D)
    # "Full-length" final conv as a VPU/XLU reduction against wf (T_OUT, D).
    wf_rep = jnp.concatenate([t_wf_ref[...]] * BATCH, axis=0)          # (B*T_OUT, D)
    contrib = jnp.sum(ht * wf_rep, axis=-1, keepdims=True)             # (B*T_OUT, 1)
    a_rows = [jnp.sum(contrib[b * T_OUT:(b + 1) * T_OUT, :], axis=0, keepdims=True)
              for b in range(BATCH)]
    a_out = jnp.concatenate(a_rows, axis=0) + t_bf_ref[...]            # (B, 1)

    # ---- single lane-dense output slab ----------------------------------------
    rec_pad = jnp.concatenate(
        [recons, jnp.zeros((N_PAD - SB, REC_COLS), f32)], axis=0)
    tmp_pad = jnp.concatenate(
        [a_out, jnp.zeros((N_PAD - BATCH, 1), f32)], axis=0)
    tail = jnp.zeros((N_PAD, COL_TAIL), f32)
    out_ref[...] = jnp.concatenate([h_all, pred_all, rec_pad, tmp_pad, tail],
                                   axis=1)


def _fused_call(ds_in_pad, actions_all, p):
    """Single pallas_call: whole (tiny) arrays resident in VMEM, no grid."""
    return pl.pallas_call(
        fused_disc_kernel,
        out_shape=jax.ShapeDtypeStruct((N_PAD, SLAB_COLS), jnp.float32),
    )(ds_in_pad, actions_all,
      p["ds_w0"], p["ds_b0"], p["ds_wmid"], p["ds_bmid"],
      p["ds_wfin_row"], p["ds_bfin"], p["ds_gamma"], p["ds_beta"],
      p["trans_w"], p["trans_b"],
      p["a2f_w_packed"], p["a2f_b_packed"],
      p["rec_w_packed"], p["rec_b_packed"],
      p["t_w1_flat"], p["t_b1"], p["t_wf"], p["t_bf"])


# ------------------------------ parameter setup --------------------------------
def _spectral_normalize(w, key, n_iter=3, eps=1e-12):
    """SNLinear approximation (plain-JAX glue, runs once at init)."""
    u = jax.random.normal(key, (w.shape[1],), jnp.float32)
    v = jnp.zeros((w.shape[0],), jnp.float32)
    for _ in range(n_iter):
        v = w @ u
        v = v / (jnp.linalg.norm(v) + eps)
        u = w.T @ v
        u = u / (jnp.linalg.norm(u) + eps)
    sigma = v @ (w @ u)
    return w / (sigma + eps)


def init_params(key):
    ks = list(jax.random.split(key, 40))

    def nrm(k, shape, scale=0.05):
        return jax.random.normal(k, shape, jnp.float32) * scale

    p = {}
    # DiscriminatorSingleLatent (self.ds)
    p["ds_w0"] = _spectral_normalize(nrm(ks[0], (LATENT_Z, DIM)), ks[1])
    p["ds_b0"] = jnp.zeros((1, DIM), jnp.float32)
    wmid = [_spectral_normalize(nrm(ks[2 + i], (DIM, DIM)), ks[6 + i])
            for i in range(4)]
    p["ds_wmid"] = jnp.stack(wmid)                       # (4, DIM, DIM)
    p["ds_bmid"] = jnp.zeros((4, DIM), jnp.float32)
    wfin = _spectral_normalize(nrm(ks[10], (DIM, 1)), ks[11])
    p["ds_wfin_row"] = wfin.T                            # (1, DIM) for VPU reduction
    p["ds_bfin"] = jnp.zeros((1, 1), jnp.float32)
    p["ds_gamma"] = jnp.ones((5, DIM), jnp.float32)      # BatchNorm1d affine defaults
    p["ds_beta"] = jnp.zeros((5, DIM), jnp.float32)
    # to_transition_feature (SNLinear(2*DIM, DIM) + LReLU)
    p["trans_w"] = _spectral_normalize(nrm(ks[12], (2 * DIM, DIM)), ks[13])
    p["trans_b"] = jnp.zeros((1, DIM), jnp.float32)
    # action_to_feats (plain Linear per agent) -> packed block-diagonal matmul
    a2f_w = [nrm(ks[14 + i], (ACTION_SPACE, A2F_OUT)) for i in range(NUM_AGENTS)]
    a2f_packed = jnp.zeros((NUM_AGENTS * ACTION_SPACE, NUM_AGENTS * A2F_OUT),
                           jnp.float32)
    for i in range(NUM_AGENTS):
        a2f_packed = a2f_packed.at[i * ACTION_SPACE:(i + 1) * ACTION_SPACE,
                                   i * A2F_OUT:(i + 1) * A2F_OUT].set(a2f_w[i])
    p["a2f_w_packed"] = a2f_packed
    p["a2f_b_packed"] = jnp.zeros((1, NUM_AGENTS * A2F_OUT), jnp.float32)
    # reconstruct_actions (SNLinear(DIM, action_space) per agent) -> one matmul
    rec_w = [_spectral_normalize(nrm(ks[18 + i], (DIM, ACTION_SPACE)), ks[22 + i])
             for i in range(NUM_AGENTS)]
    p["rec_w_packed"] = jnp.concatenate(rec_w, axis=1)   # (DIM, 12)
    p["rec_b_packed"] = jnp.zeros((1, REC_COLS), jnp.float32)
    # temporal discriminator (conv3d[0] + conv3d_final[0]) — synthetic head.
    t_w1 = nrm(ks[26], (KTAP, TEMPORAL_C_IN, CONV3D_DIM))
    p["t_w1_flat"] = t_w1.reshape(KTAP * TEMPORAL_C_IN, CONV3D_DIM)   # (512, 64)
    p["t_b1"] = jnp.zeros((1, CONV3D_DIM), jnp.float32)
    p["t_wf"] = nrm(ks[27], (T_OUT, CONV3D_DIM))
    p["t_bf"] = jnp.zeros((1, 1), jnp.float32)
    return p


# --------------------------------- forward -----------------------------------
@functools.partial(jax.jit, static_argnames=("warm_up",))
def discriminator_forward(p, images, actions, states, warm_up):
    """images: (seq, bs, latent_z); actions: list of (seq, bs, action_space);
    states: (seq+1, bs, latent_z)."""
    seq_len, batch_size, _ = actions[0].shape
    if warm_up is None or warm_up == 0:
        warm_up = 1
    assert seq_len == SEQ and batch_size == BATCH and warm_up == WARM_UP

    gt_states = states.reshape(batch_size * (seq_len + 1), -1)[: warm_up * batch_size]
    images_f = images.reshape(batch_size * seq_len, -1)
    ds_in = jnp.concatenate([gt_states, images_f], axis=0)        # (N_VALID, LATENT_Z)
    ds_in_pad = jnp.concatenate(
        [ds_in, jnp.zeros((N_PAD - N_VALID, LATENT_Z), jnp.float32)], axis=0)
    actions_all = jnp.concatenate(
        [a.reshape(batch_size * seq_len, -1) for a in actions], axis=1)  # (SB, 12)

    slab = _fused_call(ds_in_pad, actions_all, p)                 # (N_PAD, 128)

    wb = warm_up * batch_size
    sb = seq_len * batch_size
    frame_features = slab[wb:wb + sb, :DIM]
    single_frame_predictions_all = slab[wb:wb + sb, COL_PRED:COL_PRED + 1]
    recons = slab[:sb, COL_REC0:COL_REC1]
    action_recons = [recons[:, i * ACTION_SPACE:(i + 1) * ACTION_SPACE]
                     for i in range(NUM_AGENTS)]
    temporal_predictions = [slab[:batch_size, COL_TMP:COL_TMP + 1]]
    # TEMPORAL_WINDOW < 12 -> deeper conv3d blocks [1..3] are not exercised.

    return {
        "disc_features": frame_features,
        "single_frame_predictions_all": single_frame_predictions_all,
        "content_predictions": temporal_predictions,
        "neg_content_predictions": None,    # neg_actions path not exercised
        "action_recons": action_recons,
    }


# ----------------------------------- main -------------------------------------
if __name__ == "__main__":
    key = jax.random.PRNGKey(0)
    kp, ki, ks, *ka = jax.random.split(key, 3 + NUM_AGENTS)

    params = init_params(kp)
    images = jax.random.normal(ki, (SEQ, BATCH, LATENT_Z), jnp.float32)
    states = jax.random.normal(ks, (SEQ + 1, BATCH, LATENT_Z), jnp.float32)
    actions = [jax.random.normal(ka[i], (SEQ, BATCH, ACTION_SPACE), jnp.float32)
               for i in range(NUM_AGENTS)]

    out = discriminator_forward(params, images, actions, states, WARM_UP)
    jax.block_until_ready(out)

    assert out["disc_features"].shape == (SEQ * BATCH, DIM)
    assert out["single_frame_predictions_all"].shape == (SEQ * BATCH, 1)
    assert out["content_predictions"][0].shape == (BATCH, 1)
    assert all(a.shape == (SEQ * BATCH, ACTION_SPACE) for a in out["action_recons"])
    print("KERNEL_OK")
</pallas_src>

<mosaic_0001>
module attributes {stable_mosaic.version = 11 : i64} {
  func.func @fused_disc_kernel(%arg0: memref<24x32xf32, #tpu.memory_space<vmem>>, %arg1: memref<16x12xf32, #tpu.memory_space<vmem>>, %arg2: memref<32x64xf32, #tpu.memory_space<vmem>>, %arg3: memref<1x64xf32, #tpu.memory_space<vmem>>, %arg4: memref<4x64x64xf32, #tpu.memory_space<vmem>>, %arg5: memref<4x64xf32, #tpu.memory_space<vmem>>, %arg6: memref<1x64xf32, #tpu.memory_space<vmem>>, %arg7: memref<1x1xf32, #tpu.memory_space<vmem>>, %arg8: memref<5x64xf32, #tpu.memory_space<vmem>>, %arg9: memref<5x64xf32, #tpu.memory_space<vmem>>, %arg10: memref<128x64xf32, #tpu.memory_space<vmem>>, %arg11: memref<1x64xf32, #tpu.memory_space<vmem>>, %arg12: memref<12x64xf32, #tpu.memory_space<vmem>>, %arg13: memref<1x64xf32, #tpu.memory_space<vmem>>, %arg14: memref<64x12xf32, #tpu.memory_space<vmem>>, %arg15: memref<1x12xf32, #tpu.memory_space<vmem>>, %arg16: memref<512x64xf32, #tpu.memory_space<vmem>>, %arg17: memref<1x64xf32, #tpu.memory_space<vmem>>, %arg18: memref<3x64xf32, #tpu.memory_space<vmem>>, %arg19: memref<1x1xf32, #tpu.memory_space<vmem>>, %arg20: memref<24x128xf32, #tpu.memory_space<vmem>>) attributes {dimension_semantics = [], scalar_prefetch = 0 : i64, scratch_operands = 0 : i64, tpu.core_type = #tpu.core_type<tc>} {
    %c0 = arith.constant 0 : index
    %c0_0 = arith.constant 0 : index
    %0 = vector.load %arg8[%c0, %c0_0] : memref<5x64xf32, #tpu.memory_space<vmem>>, vector<5x64xf32>
    %c0_1 = arith.constant 0 : index
    %c0_2 = arith.constant 0 : index
    %1 = vector.load %arg9[%c0_1, %c0_2] : memref<5x64xf32, #tpu.memory_space<vmem>>, vector<5x64xf32>
    %2 = tpu.iota {dimensions = array<i32: 0>} : vector<24x1xi32>
    %c18_i32 = arith.constant 18 : i32
    %3 = vector.broadcast %c18_i32 : i32 to vector<24x1xi32>
    %4 = arith.cmpi slt, %2, %3 : vector<24x1xi32>
    %5 = arith.extui %4 : vector<24x1xi1> to vector<24x1xi32>
    %6 = arith.sitofp %5 : vector<24x1xi32> to vector<24x1xf32>
    %c0_3 = arith.constant 0 : index
    %c0_4 = arith.constant 0 : index
    %7 = vector.load %arg0[%c0_3, %c0_4] : memref<24x32xf32, #tpu.memory_space<vmem>>, vector<24x32xf32>
    %c0_5 = arith.constant 0 : index
    %c0_6 = arith.constant 0 : index
    %c0_7 = arith.constant 0 : index
    %8 = vector.load %arg4[%c0_5, %c0_6, %c0_7] : memref<4x64x64xf32, #tpu.memory_space<vmem>>, vector<4x64x64xf32>
    %c0_8 = arith.constant 0 : index
    %c0_9 = arith.constant 0 : index
    %9 = vector.load %arg5[%c0_8, %c0_9] : memref<4x64xf32, #tpu.memory_space<vmem>>, vector<4x64xf32>
    %c0_10 = arith.constant 0 : index
    %c0_11 = arith.constant 0 : index
    %10 = vector.load %arg2[%c0_10, %c0_11] : memref<32x64xf32, #tpu.memory_space<vmem>>, vector<32x64xf32>
    %cst = arith.constant dense<0.000000e+00> : vector<24x64xf32>
    %11 = tpu.matmul %7, %10, %cst {dimension_numbers = #tpu.dot_dimension_numbers<[1], [0], [0], [1], [0, 0, 1, 1], [], []>} : vector<24x32xf32>, vector<32x64xf32>, vector<24x64xf32> -> vector<24x64xf32>
    %c0_12 = arith.constant 0 : index
    %c0_13 = arith.constant 0 : index
    %12 = vector.load %arg3[%c0_12, %c0_13] : memref<1x64xf32, #tpu.memory_space<vmem>>, vector<1x64xf32>
    %13 = vector.broadcast %12 : vector<1x64xf32> to vector<24x64xf32>
    %14 = arith.addf %11, %13 : vector<24x64xf32>
    %15 = vector.broadcast %6 : vector<24x1xf32> to vector<24x64xf32>
    %16 = arith.mulf %14, %15 : vector<24x64xf32>
    %cst_14 = arith.constant dense<0.000000e+00> : vector<64xf32>
    %17 = vector.multi_reduction <add>, %16, %cst_14 [0] : vector<24x64xf32> to vector<64xf32>
    %18 = vector.shape_cast %17 : vector<64xf32> to vector<1x64xf32>
    %cst_15 = arith.constant 0.055555556 : f32
    %19 = vector.broadcast %cst_15 : f32 to vector<1x64xf32>
    %20 = arith.mulf %18, %19 : vector<1x64xf32>
    %21 = arith.mulf %16, %14 : vector<24x64xf32>
    %cst_16 = arith.constant dense<0.000000e+00> : vector<64xf32>
    %22 = vector.multi_reduction <add>, %21, %cst_16 [0] : vector<24x64xf32> to vector<64xf32>
    %23 = vector.shape_cast %22 : vector<64xf32> to vector<1x64xf32>
    %cst_17 = arith.constant 0.055555556 : f32
    %24 = vector.broadcast %cst_17 : f32 to vector<1x64xf32>
    %25 = arith.mulf %23, %24 : vector<1x64xf32>
    %26 = arith.mulf %20, %20 : vector<1x64xf32>
    %27 = arith.subf %25, %26 : vector<1x64xf32>
    %28 = vector.broadcast %20 : vector<1x64xf32> to vector<24x64xf32>
    %29 = arith.subf %14, %28 : vector<24x64xf32>
    %cst_18 = arith.constant 9.99999974E-6 : f32
    %30 = vector.broadcast %cst_18 : f32 to vector<1x64xf32>
    %31 = arith.addf %27, %30 : vector<1x64xf32>
    %32 = math.rsqrt %31 : vector<1x64xf32>
    %33 = vector.broadcast %32 : vector<1x64xf32> to vector<24x64xf32>
    %34 = arith.mulf %29, %33 : vector<24x64xf32>
    %35 = vector.extract_strided_slice %0 {offsets = [0, 0], sizes = [1, 64], strides = [1, 1]} : vector<5x64xf32> to vector<1x64xf32>
    %36 = vector.broadcast %35 : vector<1x64xf32> to vector<24x64xf32>
    %37 = arith.mulf %34, %36 : vector<24x64xf32>
    %38 = vector.extract_strided_slice %1 {offsets = [0, 0], sizes = [1, 64], strides = [1, 1]} : vector<5x64xf32> to vector<1x64xf32>
    %39 = vector.broadcast %38 : vector<1x64xf32> to vector<24x64xf32>
    %40 = arith.addf %37, %39 : vector<24x64xf32>
    %cst_19 = arith.constant 0.000000e+00 : f32
    %41 = vector.broadcast %cst_19 : f32 to vector<24x64xf32>
    %42 = arith.cmpf oge, %40, %41 : vector<24x64xf32>
    %cst_20 = arith.constant 2.000000e-01 : f32
    %43 = vector.broadcast %cst_20 : f32 to vector<24x64xf32>
    %44 = arith.mulf %43, %40 : vector<24x64xf32>
    %45 = arith.select %42, %40, %44 : vector<24x64xi1>, vector<24x64xf32>
    %46 = vector.extract_strided_slice %8 {offsets = [0, 0, 0], sizes = [1, 64, 64], strides = [1, 1, 1]} : vector<4x64x64xf32> to vector<1x64x64xf32>
    %47 = vector.shape_cast %46 : vector<1x64x64xf32> to vector<64x64xf32>
    %cst_21 = arith.constant dense<0.000000e+00> : vector<24x64xf32>
    %48 = tpu.matmul %45, %47, %cst_21 {dimension_numbers = #tpu.dot_dimension_numbers<[1], [0], [0], [1], [0, 0, 1, 1], [], []>} : vector<24x64xf32>, vector<64x64xf32>, vector<24x64xf32> -> vector<24x64xf32>
    %49 = vector.extract_strided_slice %9 {offsets = [0, 0], sizes = [1, 64], strides = [1, 1]} : vector<4x64xf32> to vector<1x64xf32>
    %50 = vector.broadcast %49 : vector<1x64xf32> to vector<24x64xf32>
    %51 = arith.addf %48, %50 : vector<24x64xf32>
    %52 = vector.broadcast %6 : vector<24x1xf32> to vector<24x64xf32>
    %53 = arith.mulf %51, %52 : vector<24x64xf32>
    %cst_22 = arith.constant dense<0.000000e+00> : vector<64xf32>
    %54 = vector.multi_reduction <add>, %53, %cst_22 [0] : vector<24x64xf32> to vector<64xf32>
    %55 = vector.shape_cast %54 : vector<64xf32> to vector<1x64xf32>
    %cst_23 = arith.constant 0.055555556 : f32
    %56 = vector.broadcast %cst_23 : f32 to vector<1x64xf32>
    %57 = arith.mulf %55, %56 : vector<1x64xf32>
    %58 = arith.mulf %53, %51 : vector<24x64xf32>
    %cst_24 = arith.constant dense<0.000000e+00> : vector<64xf32>
    %59 = vector.multi_reduction <add>, %58, %cst_24 [0] : vector<24x64xf32> to vector<64xf32>
    %60 = vector.shape_cast %59 : vector<64xf32> to vector<1x64xf32>
    %cst_25 = arith.constant 0.055555556 : f32
    %61 = vector.broadcast %cst_25 : f32 to vector<1x64xf32>
    %62 = arith.mulf %60, %61 : vector<1x64xf32>
    %63 = arith.mulf %57, %57 : vector<1x64xf32>
    %64 = arith.subf %62, %63 : vector<1x64xf32>
    %65 = vector.broadcast %57 : vector<1x64xf32> to vector<24x64xf32>
    %66 = arith.subf %51, %65 : vector<24x64xf32>
    %cst_26 = arith.constant 9.99999974E-6 : f32
    %67 = vector.broadcast %cst_26 : f32 to vector<1x64xf32>
    %68 = arith.addf %64, %67 : vector<1x64xf32>
    %69 = math.rsqrt %68 : vector<1x64xf32>
    %70 = vector.broadcast %69 : vector<1x64xf32> to vector<24x64xf32>
    %71 = arith.mulf %66, %70 : vector<24x64xf32>
    %72 = vector.extract_strided_slice %0 {offsets = [1, 0], sizes = [1, 64], strides = [1, 1]} : vector<5x64xf32> to vector<1x64xf32>
    %73 = vector.broadcast %72 : vector<1x64xf32> to vector<24x64xf32>
    %74 = arith.mulf %71, %73 : vector<24x64xf32>
    %75 = vector.extract_strided_slice %1 {offsets = [1, 0], sizes = [1, 64], strides = [1, 1]} : vector<5x64xf32> to vector<1x64xf32>
    %76 = vector.broadcast %75 : vector<1x64xf32> to vector<24x64xf32>
    %77 = arith.addf %74, %76 : vector<24x64xf32>
    %cst_27 = arith.constant 0.000000e+00 : f32
    %78 = vector.broadcast %cst_27 : f32 to vector<24x64xf32>
    %79 = arith.cmpf oge, %77, %78 : vector<24x64xf32>
    %cst_28 = arith.constant 2.000000e-01 : f32
    %80 = vector.broadcast %cst_28 : f32 to vector<24x64xf32>
    %81 = arith.mulf %80, %77 : vector<24x64xf32>
    %82 = arith.select %79, %77, %81 : vector<24x64xi1>, vector<24x64xf32>
    %83 = vector.extract_strided_slice %8 {offsets = [1, 0, 0], sizes = [1, 64, 64], strides = [1, 1, 1]} : vector<4x64x64xf32> to vector<1x64x64xf32>
    %84 = vector.shape_cast %83 : vector<1x64x64xf32> to vector<64x64xf32>
    %cst_29 = arith.constant dense<0.000000e+00> : vector<24x64xf32>
    %85 = tpu.matmul %82, %84, %cst_29 {dimension_numbers = #tpu.dot_dimension_numbers<[1], [0], [0], [1], [0, 0, 1, 1], [], []>} : vector<24x64xf32>, vector<64x64xf32>, vector<24x64xf32> -> vector<24x64xf32>
    %86 = vector.extract_strided_slice %9 {offsets = [1, 0], sizes = [1, 64], strides = [1, 1]} : vector<4x64xf32> to vector<1x64xf32>
    %87 = vector.broadcast %86 : vector<1x64xf32> to vector<24x64xf32>
    %88 = arith.addf %85, %87 : vector<24x64xf32>
    %89 = vector.broadcast %6 : vector<24x1xf32> to vector<24x64xf32>
    %90 = arith.mulf %88, %89 : vector<24x64xf32>
    %cst_30 = arith.constant dense<0.000000e+00> : vector<64xf32>
    %91 = vector.multi_reduction <add>, %90, %cst_30 [0] : vector<24x64xf32> to vector<64xf32>
    %92 = vector.shape_cast %91 : vector<64xf32> to vector<1x64xf32>
    %cst_31 = arith.constant 0.055555556 : f32
    %93 = vector.broadcast %cst_31 : f32 to vector<1x64xf32>
    %94 = arith.mulf %92, %93 : vector<1x64xf32>
    %95 = arith.mulf %90, %88 : vector<24x64xf32>
    %cst_32 = arith.constant dense<0.000000e+00> : vector<64xf32>
    %96 = vector.multi_reduction <add>, %95, %cst_32 [0] : vector<24x64xf32> to vector<64xf32>
    %97 = vector.shape_cast %96 : vector<64xf32> to vector<1x64xf32>
    %cst_33 = arith.constant 0.055555556 : f32
    %98 = vector.broadcast %cst_33 : f32 to vector<1x64xf32>
    %99 = arith.mulf %97, %98 : vector<1x64xf32>
    %100 = arith.mulf %94, %94 : vector<1x64xf32>
    %101 = arith.subf %99, %100 : vector<1x64xf32>
    %102 = vector.broadcast %94 : vector<1x64xf32> to vector<24x64xf32>
    %103 = arith.subf %88, %102 : vector<24x64xf32>
    %cst_34 = arith.constant 9.99999974E-6 : f32
    %104 = vector.broadcast %cst_34 : f32 to vector<1x64xf32>
    %105 = arith.addf %101, %104 : vector<1x64xf32>
    %106 = math.rsqrt %105 : vector<1x64xf32>
    %107 = vector.broadcast %106 : vector<1x64xf32> to vector<24x64xf32>
    %108 = arith.mulf %103, %107 : vector<24x64xf32>
    %109 = vector.extract_strided_slice %0 {offsets = [2, 0], sizes = [1, 64], strides = [1, 1]} : vector<5x64xf32> to vector<1x64xf32>
    %110 = vector.broadcast %109 : vector<1x64xf32> to vector<24x64xf32>
    %111 = arith.mulf %108, %110 : vector<24x64xf32>
    %112 = vector.extract_strided_slice %1 {offsets = [2, 0], sizes = [1, 64], strides = [1, 1]} : vector<5x64xf32> to vector<1x64xf32>
    %113 = vector.broadcast %112 : vector<1x64xf32> to vector<24x64xf32>
    %114 = arith.addf %111, %113 : vector<24x64xf32>
    %cst_35 = arith.constant 0.000000e+00 : f32
    %115 = vector.broadcast %cst_35 : f32 to vector<24x64xf32>
    %116 = arith.cmpf oge, %114, %115 : vector<24x64xf32>
    %cst_36 = arith.constant 2.000000e-01 : f32
    %117 = vector.broadcast %cst_36 : f32 to vector<24x64xf32>
    %118 = arith.mulf %117, %114 : vector<24x64xf32>
    %119 = arith.select %116, %114, %118 : vector<24x64xi1>, vector<24x64xf32>
    %120 = vector.extract_strided_slice %8 {offsets = [2, 0, 0], sizes = [1, 64, 64], strides = [1, 1, 1]} : vector<4x64x64xf32> to vector<1x64x64xf32>
    %121 = vector.shape_cast %120 : vector<1x64x64xf32> to vector<64x64xf32>
    %cst_37 = arith.constant dense<0.000000e+00> : vector<24x64xf32>
    %122 = tpu.matmul %119, %121, %cst_37 {dimension_numbers = #tpu.dot_dimension_numbers<[1], [0], [0], [1], [0, 0, 1, 1], [], []>} : vector<24x64xf32>, vector<64x64xf32>, vector<24x64xf32> -> vector<24x64xf32>
    %123 = vector.extract_strided_slice %9 {offsets = [2, 0], sizes = [1, 64], strides = [1, 1]} : vector<4x64xf32> to vector<1x64xf32>
    %124 = vector.broadcast %123 : vector<1x64xf32> to vector<24x64xf32>
    %125 = arith.addf %122, %124 : vector<24x64xf32>
    %126 = vector.broadcast %6 : vector<24x1xf32> to vector<24x64xf32>
    %127 = arith.mulf %125, %126 : vector<24x64xf32>
    %cst_38 = arith.constant dense<0.000000e+00> : vector<64xf32>
    %128 = vector.multi_reduction <add>, %127, %cst_38 [0] : vector<24x64xf32> to vector<64xf32>
    %129 = vector.shape_cast %128 : vector<64xf32> to vector<1x64xf32>
    %cst_39 = arith.constant 0.055555556 : f32
    %130 = vector.broadcast %cst_39 : f32 to vector<1x64xf32>
    %131 = arith.mulf %129, %130 : vector<1x64xf32>
    %132 = arith.mulf %127, %125 : vector<24x64xf32>
    %cst_40 = arith.constant dense<0.000000e+00> : vector<64xf32>
    %133 = vector.multi_reduction <add>, %132, %cst_40 [0] : vector<24x64xf32> to vector<64xf32>
    %134 = vector.shape_cast %133 : vector<64xf32> to vector<1x64xf32>
    %cst_41 = arith.constant 0.055555556 : f32
    %135 = vector.broadcast %cst_41 : f32 to vector<1x64xf32>
    %136 = arith.mulf %134, %135 : vector<1x64xf32>
    %137 = arith.mulf %131, %131 : vector<1x64xf32>
    %138 = arith.subf %136, %137 : vector<1x64xf32>
    %139 = vector.broadcast %131 : vector<1x64xf32> to vector<24x64xf32>
    %140 = arith.subf %125, %139 : vector<24x64xf32>
    %cst_42 = arith.constant 9.99999974E-6 : f32
    %141 = vector.broadcast %cst_42 : f32 to vector<1x64xf32>
    %142 = arith.addf %138, %141 : vector<1x64xf32>
    %143 = math.rsqrt %142 : vector<1x64xf32>
    %144 = vector.broadcast %143 : vector<1x64xf32> to vector<24x64xf32>
    %145 = arith.mulf %140, %144 : vector<24x64xf32>
    %146 = vector.extract_strided_slice %0 {offsets = [3, 0], sizes = [1, 64], strides = [1, 1]} : vector<5x64xf32> to vector<1x64xf32>
    %147 = vector.broadcast %146 : vector<1x64xf32> to vector<24x64xf32>
    %148 = arith.mulf %145, %147 : vector<24x64xf32>
    %149 = vector.extract_strided_slice %1 {offsets = [3, 0], sizes = [1, 64], strides = [1, 1]} : vector<5x64xf32> to vector<1x64xf32>
    %150 = vector.broadcast %149 : vector<1x64xf32> to vector<24x64xf32>
    %151 = arith.addf %148, %150 : vector<24x64xf32>
    %cst_43 = arith.constant 0.000000e+00 : f32
    %152 = vector.broadcast %cst_43 : f32 to vector<24x64xf32>
    %153 = arith.cmpf oge, %151, %152 : vector<24x64xf32>
    %cst_44 = arith.constant 2.000000e-01 : f32
    %154 = vector.broadcast %cst_44 : f32 to vector<24x64xf32>
    %155 = arith.mulf %154, %151 : vector<24x64xf32>
    %156 = arith.select %153, %151, %155 : vector<24x64xi1>, vector<24x64xf32>
    %157 = vector.extract_strided_slice %8 {offsets = [3, 0, 0], sizes = [1, 64, 64], strides = [1, 1, 1]} : vector<4x64x64xf32> to vector<1x64x64xf32>
    %158 = vector.shape_cast %157 : vector<1x64x64xf32> to vector<64x64xf32>
    %cst_45 = arith.constant dense<0.000000e+00> : vector<24x64xf32>
    %159 = tpu.matmul %156, %158, %cst_45 {dimension_numbers = #tpu.dot_dimension_numbers<[1], [0], [0], [1], [0, 0, 1, 1], [], []>} : vector<24x64xf32>, vector<64x64xf32>, vector<24x64xf32> -> vector<24x64xf32>
    %160 = vector.extract_strided_slice %9 {offsets = [3, 0], sizes = [1, 64], strides = [1, 1]} : vector<4x64xf32> to vector<1x64xf32>
    %161 = vector.broadcast %160 : vector<1x64xf32> to vector<24x64xf32>
    %162 = arith.addf %159, %161 : vector<24x64xf32>
    %163 = vector.broadcast %6 : vector<24x1xf32> to vector<24x64xf32>
    %164 = arith.mulf %162, %163 : vector<24x64xf32>
    %cst_46 = arith.constant dense<0.000000e+00> : vector<64xf32>
    %165 = vector.multi_reduction <add>, %164, %cst_46 [0] : vector<24x64xf32> to vector<64xf32>
    %166 = vector.shape_cast %165 : vector<64xf32> to vector<1x64xf32>
    %cst_47 = arith.constant 0.055555556 : f32
    %167 = vector.broadcast %cst_47 : f32 to vector<1x64xf32>
    %168 = arith.mulf %166, %167 : vector<1x64xf32>
    %169 = arith.mulf %164, %162 : vector<24x64xf32>
    %cst_48 = arith.constant dense<0.000000e+00> : vector<64xf32>
    %170 = vector.multi_reduction <add>, %169, %cst_48 [0] : vector<24x64xf32> to vector<64xf32>
    %171 = vector.shape_cast %170 : vector<64xf32> to vector<1x64xf32>
    %cst_49 = arith.constant 0.055555556 : f32
    %172 = vector.broadcast %cst_49 : f32 to vector<1x64xf32>
    %173 = arith.mulf %171, %172 : vector<1x64xf32>
    %174 = arith.mulf %168, %168 : vector<1x64xf32>
    %175 = arith.subf %173, %174 : vector<1x64xf32>
    %176 = vector.broadcast %168 : vector<1x64xf32> to vector<24x64xf32>
    %177 = arith.subf %162, %176 : vector<24x64xf32>
    %cst_50 = arith.constant 9.99999974E-6 : f32
    %178 = vector.broadcast %cst_50 : f32 to vector<1x64xf32>
    %179 = arith.addf %175, %178 : vector<1x64xf32>
    %180 = math.rsqrt %179 : vector<1x64xf32>
    %181 = vector.broadcast %180 : vector<1x64xf32> to vector<24x64xf32>
    %182 = arith.mulf %177, %181 : vector<24x64xf32>
    %183 = vector.extract_strided_slice %0 {offsets = [4, 0], sizes = [1, 64], strides = [1, 1]} : vector<5x64xf32> to vector<1x64xf32>
    %184 = vector.broadcast %183 : vector<1x64xf32> to vector<24x64xf32>
    %185 = arith.mulf %182, %184 : vector<24x64xf32>
    %186 = vector.extract_strided_slice %1 {offsets = [4, 0], sizes = [1, 64], strides = [1, 1]} : vector<5x64xf32> to vector<1x64xf32>
    %187 = vector.broadcast %186 : vector<1x64xf32> to vector<24x64xf32>
    %188 = arith.addf %185, %187 : vector<24x64xf32>
    %cst_51 = arith.constant 0.000000e+00 : f32
    %189 = vector.broadcast %cst_51 : f32 to vector<24x64xf32>
    %190 = arith.cmpf oge, %188, %189 : vector<24x64xf32>
    %cst_52 = arith.constant 2.000000e-01 : f32
    %191 = vector.broadcast %cst_52 : f32 to vector<24x64xf32>
    %192 = arith.mulf %191, %188 : vector<24x64xf32>
    %193 = arith.select %190, %188, %192 : vector<24x64xi1>, vector<24x64xf32>
    %c0_53 = arith.constant 0 : index
    %c0_54 = arith.constant 0 : index
    %194 = vector.load %arg6[%c0_53, %c0_54] : memref<1x64xf32, #tpu.memory_space<vmem>>, vector<1x64xf32>
    %195 = vector.broadcast %194 : vector<1x64xf32> to vector<24x64xf32>
    %196 = arith.mulf %193, %195 : vector<24x64xf32>
    %cst_55 = arith.constant dense<0.000000e+00> : vector<24xf32>
    %197 = vector.multi_reduction <add>, %196, %cst_55 [1] : vector<24x64xf32> to vector<24xf32>
    %198 = vector.shape_cast %197 : vector<24xf32> to vector<24x1xf32>
    %c0_56 = arith.constant 0 : index
    %c0_57 = arith.constant 0 : index
    %199 = vector.load %arg7[%c0_56, %c0_57] : memref<1x1xf32, #tpu.memory_space<vmem>>, vector<1x1xf32>
    %200 = vector.broadcast %199 : vector<1x1xf32> to vector<24x1xf32>
    %201 = arith.addf %198, %200 : vector<24x1xf32>
    %202 = vector.extract_strided_slice %156 {offsets = [0, 0], sizes = [2, 64], strides = [1, 1]} : vector<24x64xf32> to vector<2x64xf32>
    %203 = vector.extract_strided_slice %156 {offsets = [2, 0], sizes = [14, 64], strides = [1, 1]} : vector<24x64xf32> to vector<14x64xf32>
    %204 = tpu.concatenate %202, %203 in 0 : vector<2x64xf32>, vector<14x64xf32> -> vector<16x64xf32>
    %205 = vector.extract_strided_slice %156 {offsets = [2, 0], sizes = [16, 64], strides = [1, 1]} : vector<24x64xf32> to vector<16x64xf32>
    %206 = tpu.concatenate %204, %205 in 1 : vector<16x64xf32>, vector<16x64xf32> -> vector<16x128xf32>
    %c0_58 = arith.constant 0 : index
    %c0_59 = arith.constant 0 : index
    %207 = vector.load %arg10[%c0_58, %c0_59] : memref<128x64xf32, #tpu.memory_space<vmem>>, vector<128x64xf32>
    %cst_60 = arith.constant dense<0.000000e+00> : vector<16x64xf32>
    %208 = tpu.matmul %206, %207, %cst_60 {dimension_numbers = #tpu.dot_dimension_numbers<[1], [0], [0], [1], [0, 0, 1, 1], [], []>} : vector<16x128xf32>, vector<128x64xf32>, vector<16x64xf32> -> vector<16x64xf32>
    %c0_61 = arith.constant 0 : index
    %c0_62 = arith.constant 0 : index
    %209 = vector.load %arg11[%c0_61, %c0_62] : memref<1x64xf32, #tpu.memory_space<vmem>>, vector<1x64xf32>
    %210 = vector.broadcast %209 : vector<1x64xf32> to vector<16x64xf32>
    %211 = arith.addf %208, %210 : vector<16x64xf32>
    %cst_63 = arith.constant 0.000000e+00 : f32
    %212 = vector.broadcast %cst_63 : f32 to vector<16x64xf32>
    %213 = arith.cmpf oge, %211, %212 : vector<16x64xf32>
    %cst_64 = arith.constant 2.000000e-01 : f32
    %214 = vector.broadcast %cst_64 : f32 to vector<16x64xf32>
    %215 = arith.mulf %214, %211 : vector<16x64xf32>
    %216 = arith.select %213, %211, %215 : vector<16x64xi1>, vector<16x64xf32>
    %c0_65 = arith.constant 0 : index
    %c0_66 = arith.constant 0 : index
    %217 = vector.load %arg1[%c0_65, %c0_66] : memref<16x12xf32, #tpu.memory_space<vmem>>, vector<16x12xf32>
    %c0_67 = arith.constant 0 : index
    %c0_68 = arith.constant 0 : index
    %218 = vector.load %arg12[%c0_67, %c0_68] : memref<12x64xf32, #tpu.memory_space<vmem>>, vector<12x64xf32>
    %cst_69 = arith.constant dense<0.000000e+00> : vector<16x64xf32>
    %219 = tpu.matmul %217, %218, %cst_69 {dimension_numbers = #tpu.dot_dimension_numbers<[1], [0], [0], [1], [0, 0, 1, 1], [], []>} : vector<16x12xf32>, vector<12x64xf32>, vector<16x64xf32> -> vector<16x64xf32>
    %c0_70 = arith.constant 0 : index
    %c0_71 = arith.constant 0 : index
    %220 = vector.load %arg13[%c0_70, %c0_71] : memref<1x64xf32, #tpu.memory_space<vmem>>, vector<1x64xf32>
    %221 = vector.broadcast %220 : vector<1x64xf32> to vector<16x64xf32>
    %222 = arith.addf %219, %221 : vector<16x64xf32>
    %c0_72 = arith.constant 0 : index
    %c0_73 = arith.constant 0 : index
    %223 = vector.load %arg14[%c0_72, %c0_73] : memref<64x12xf32, #tpu.memory_space<vmem>>, vector<64x12xf32>
    %cst_74 = arith.constant dense<0.000000e+00> : vector<16x12xf32>
    %224 = tpu.matmul %216, %223, %cst_74 {dimension_numbers = #tpu.dot_dimension_numbers<[1], [0], [0], [1], [0, 0, 1, 1], [], []>} : vector<16x64xf32>, vector<64x12xf32>, vector<16x12xf32> -> vector<16x12xf32>
    %c0_75 = arith.constant 0 : index
    %c0_76 = arith.constant 0 : index
    %225 = vector.load %arg15[%c0_75, %c0_76] : memref<1x12xf32, #tpu.memory_space<vmem>>, vector<1x12xf32>
    %226 = vector.broadcast %225 : vector<1x12xf32> to vector<16x12xf32>
    %227 = arith.addf %224, %226 : vector<16x12xf32>
    %228 = tpu.concatenate %222, %216 in 1 : vector<16x64xf32>, vector<16x64xf32> -> vector<16x128xf32>
    %229 = vector.extract_strided_slice %228 {offsets = [0, 0], sizes = [1, 128], strides = [1, 1]} : vector<16x128xf32> to vector<1x128xf32>
    %230 = vector.extract_strided_slice %228 {offsets = [2, 0], sizes = [1, 128], strides = [1, 1]} : vector<16x128xf32> to vector<1x128xf32>
    %231 = vector.extract_strided_slice %228 {offsets = [4, 0], sizes = [1, 128], strides = [1, 1]} : vector<16x128xf32> to vector<1x128xf32>
    %232 = vector.extract_strided_slice %228 {offsets = [6, 0], sizes = [1, 128], strides = [1, 1]} : vector<16x128xf32> to vector<1x128xf32>
    %233 = tpu.concatenate %229, %230, %231, %232 in 1 : vector<1x128xf32>, vector<1x128xf32>, vector<1x128xf32>, vector<1x128xf32> -> vector<1x512xf32>
    %234 = vector.extract_strided_slice %228 {offsets = [4, 0], sizes = [1, 128], strides = [1, 1]} : vector<16x128xf32> to vector<1x128xf32>
    %235 = vector.extract_strided_slice %228 {offsets = [6, 0], sizes = [1, 128], strides = [1, 1]} : vector<16x128xf32> to vector<1x128xf32>
    %236 = vector.extract_strided_slice %228 {offsets = [8, 0], sizes = [1, 128], strides = [1, 1]} : vector<16x128xf32> to vector<1x128xf32>
    %237 = vector.extract_strided_slice %228 {offsets = [10, 0], sizes = [1, 128], strides = [1, 1]} : vector<16x128xf32> to vector<1x128xf32>
    %238 = tpu.concatenate %234, %235, %236, %237 in 1 : vector<1x128xf32>, vector<1x128xf32>, vector<1x128xf32>, vector<1x128xf32> -> vector<1x512xf32>
    %239 = vector.extract_strided_slice %228 {offsets = [8, 0], sizes = [1, 128], strides = [1, 1]} : vector<16x128xf32> to vector<1x128xf32>
    %240 = vector.extract_strided_slice %228 {offsets = [10, 0], sizes = [1, 128], strides = [1, 1]} : vector<16x128xf32> to vector<1x128xf32>
    %241 = vector.extract_strided_slice %228 {offsets = [12, 0], sizes = [1, 128], strides = [1, 1]} : vector<16x128xf32> to vector<1x128xf32>
    %242 = vector.extract_strided_slice %228 {offsets = [14, 0], sizes = [1, 128], strides = [1, 1]} : vector<16x128xf32> to vector<1x128xf32>
    %243 = tpu.concatenate %239, %240, %241, %242 in 1 : vector<1x128xf32>, vector<1x128xf32>, vector<1x128xf32>, vector<1x128xf32> -> vector<1x512xf32>
    %244 = vector.extract_strided_slice %228 {offsets = [1, 0], sizes = [1, 128], strides = [1, 1]} : vector<16x128xf32> to vector<1x128xf32>
    %245 = vector.extract_strided_slice %228 {offsets = [3, 0], sizes = [1, 128], strides = [1, 1]} : vector<16x128xf32> to vector<1x128xf32>
    %246 = vector.extract_strided_slice %228 {offsets = [5, 0], sizes = [1, 128], strides = [1, 1]} : vector<16x128xf32> to vector<1x128xf32>
    %247 = vector.extract_strided_slice %228 {offsets = [7, 0], sizes = [1, 128], strides = [1, 1]} : vector<16x128xf32> to vector<1x128xf32>
    %248 = tpu.concatenate %244, %245, %246, %247 in 1 : vector<1x128xf32>, vector<1x128xf32>, vector<1x128xf32>, vector<1x128xf32> -> vector<1x512xf32>
    %249 = vector.extract_strided_slice %228 {offsets = [5, 0], sizes = [1, 128], strides = [1, 1]} : vector<16x128xf32> to vector<1x128xf32>
    %250 = vector.extract_strided_slice %228 {offsets = [7, 0], sizes = [1, 128], strides = [1, 1]} : vector<16x128xf32> to vector<1x128xf32>
    %251 = vector.extract_strided_slice %228 {offsets = [9, 0], sizes = [1, 128], strides = [1, 1]} : vector<16x128xf32> to vector<1x128xf32>
    %252 = vector.extract_strided_slice %228 {offsets = [11, 0], sizes = [1, 128], strides = [1, 1]} : vector<16x128xf32> to vector<1x128xf32>
    %253 = tpu.concatenate %249, %250, %251, %252 in 1 : vector<1x128xf32>, vector<1x128xf32>, vector<1x128xf32>, vector<1x128xf32> -> vector<1x512xf32>
    %254 = vector.extract_strided_slice %228 {offsets = [9, 0], sizes = [1, 128], strides = [1, 1]} : vector<16x128xf32> to vector<1x128xf32>
    %255 = vector.extract_strided_slice %228 {offsets = [11, 0], sizes = [1, 128], strides = [1, 1]} : vector<16x128xf32> to vector<1x128xf32>
    %256 = vector.extract_strided_slice %228 {offsets = [13, 0], sizes = [1, 128], strides = [1, 1]} : vector<16x128xf32> to vector<1x128xf32>
    %257 = vector.extract_strided_slice %228 {offsets = [15, 0], sizes = [1, 128], strides = [1, 1]} : vector<16x128xf32> to vector<1x128xf32>
    %258 = tpu.concatenate %254, %255, %256, %257 in 1 : vector<1x128xf32>, vector<1x128xf32>, vector<1x128xf32>, vector<1x128xf32> -> vector<1x512xf32>
    %259 = tpu.concatenate %233, %238, %243, %248, %253, %258 in 0 : vector<1x512xf32>, vector<1x512xf32>, vector<1x512xf32>, vector<1x512xf32>, vector<1x512xf32>, vector<1x512xf32> -> vector<6x512xf32>
    %c0_77 = arith.constant 0 : index
    %c0_78 = arith.constant 0 : index
    %260 = vector.load %arg16[%c0_77, %c0_78] : memref<512x64xf32, #tpu.memory_space<vmem>>, vector<512x64xf32>
    %cst_79 = arith.constant dense<0.000000e+00> : vector<6x64xf32>
    %261 = tpu.matmul %259, %260, %cst_79 {dimension_numbers = #tpu.dot_dimension_numbers<[1], [0], [0], [1], [0, 0, 1, 1], [], []>} : vector<6x512xf32>, vector<512x64xf32>, vector<6x64xf32> -> vector<6x64xf32>
    %c0_80 = arith.constant 0 : index
    %c0_81 = arith.constant 0 : index
    %262 = vector.load %arg17[%c0_80, %c0_81] : memref<1x64xf32, #tpu.memory_space<vmem>>, vector<1x64xf32>
    %263 = vector.broadcast %262 : vector<1x64xf32> to vector<6x64xf32>
    %264 = arith.addf %261, %263 : vector<6x64xf32>
    %cst_82 = arith.constant 0.000000e+00 : f32
    %265 = vector.broadcast %cst_82 : f32 to vector<6x64xf32>
    %266 = arith.cmpf oge, %264, %265 : vector<6x64xf32>
    %cst_83 = arith.constant 2.000000e-01 : f32
    %267 = vector.broadcast %cst_83 : f32 to vector<6x64xf32>
    %268 = arith.mulf %267, %264 : vector<6x64xf32>
    %269 = arith.select %266, %264, %268 : vector<6x64xi1>, vector<6x64xf32>
    %c0_84 = arith.constant 0 : index
    %c0_85 = arith.constant 0 : index
    %270 = vector.load %arg18[%c0_84, %c0_85] : memref<3x64xf32, #tpu.memory_space<vmem>>, vector<3x64xf32>
    %271 = tpu.concatenate %270, %270 in 0 : vector<3x64xf32>, vector<3x64xf32> -> vector<6x64xf32>
    %272 = arith.mulf %269, %271 : vector<6x64xf32>
    %cst_86 = arith.constant dense<0.000000e+00> : vector<6xf32>
    %273 = vector.multi_reduction <add>, %272, %cst_86 [1] : vector<6x64xf32> to vector<6xf32>
    %274 = vector.shape_cast %273 : vector<6xf32> to vector<6x1xf32>
    %275 = vector.extract_strided_slice %274 {offsets = [0, 0], sizes = [3, 1], strides = [1, 1]} : vector<6x1xf32> to vector<3x1xf32>
    %cst_87 = arith.constant dense<0.000000e+00> : vector<1xf32>
    %276 = vector.multi_reduction <add>, %275, %cst_87 [0] : vector<3x1xf32> to vector<1xf32>
    %277 = vector.shape_cast %276 : vector<1xf32> to vector<1x1xf32>
    %278 = vector.extract_strided_slice %274 {offsets = [3, 0], sizes = [3, 1], strides = [1, 1]} : vector<6x1xf32> to vector<3x1xf32>
    %cst_88 = arith.constant dense<0.000000e+00> : vector<1xf32>
    %279 = vector.multi_reduction <add>, %278, %cst_88 [0] : vector<3x1xf32> to vector<1xf32>
    %280 = vector.shape_cast %279 : vector<1xf32> to vector<1x1xf32>
    %281 = tpu.concatenate %277, %280 in 0 : vector<1x1xf32>, vector<1x1xf32> -> vector<2x1xf32>
    %c0_89 = arith.constant 0 : index
    %c0_90 = arith.constant 0 : index
    %282 = vector.load %arg19[%c0_89, %c0_90] : memref<1x1xf32, #tpu.memory_space<vmem>>, vector<1x1xf32>
    %283 = vector.broadcast %282 : vector<1x1xf32> to vector<2x1xf32>
    %284 = arith.addf %281, %283 : vector<2x1xf32>
    %cst_91 = arith.constant 0.000000e+00 : f32
    %285 = vector.broadcast %cst_91 : f32 to vector<8x12xf32>
    %286 = tpu.concatenate %227, %285 in 0 : vector<16x12xf32>, vector<8x12xf32> -> vector<24x12xf32>
    %cst_92 = arith.constant 0.000000e+00 : f32
    %287 = vector.broadcast %cst_92 : f32 to vector<22x1xf32>
    %288 = tpu.concatenate %284, %287 in 0 : vector<2x1xf32>, vector<22x1xf32> -> vector<24x1xf32>
    %cst_93 = arith.constant 0.000000e+00 : f32
    %289 = vector.broadcast %cst_93 : f32 to vector<24x50xf32>
    %290 = tpu.concatenate %156, %201, %286, %288, %289 in 1 : vector<24x64xf32>, vector<24x1xf32>, vector<24x12xf32>, vector<24x1xf32>, vector<24x50xf32> -> vector<24x128xf32>
    %c0_94 = arith.constant 0 : index
    %c0_95 = arith.constant 0 : index
    %291 = vector.load %arg20[%c0_94, %c0_95] : memref<24x128xf32, #tpu.memory_space<vmem>>, vector<24x128xf32>
    tpu.vector_store %arg20[%c0_94, %c0_95], %290 {strides = array<i32>} : memref<24x128xf32, #tpu.memory_space<vmem>>, vector<24x128xf32>,
    return
  }
}

</mosaic_0001>

<llo_original>
// kernel: discriminator_forward.1
$region0: #{discriminator_forward.1}
  #allocation0 [shape = 'u32[]', space=smem, size = 0x4, offset = 0x4, fixed_abs, tag = 'smem constant byte address 0x4 - core index']
  #allocation1 [shape = 'u32[72,128]{1,0:T(1,128)}', space=vmem, size = 0x9000, scoped, tag = 'internal scratch']
  #allocation2 [shape = 'f32[1,1]{1,0:T(1,128)S(1)}', space=vmem, size = 0x200, scoped, tag = 'scoped memory for discriminator_forward.1']
  #allocation3 [shape = 'f32[1,1]{1,0:T(1,128)S(1)}', space=vmem, size = 0x200, scoped, tag = 'scoped memory for discriminator_forward.1']
  %s0 = inlined_call_operand.vmem [shape: f32[24,32], index: 0, kind: input, shape index: {}]
  %s1 = inlined_call_operand.vmem [shape: f32[16,12], index: 1, kind: input, shape index: {}]
  %s2 = inlined_call_operand.vmem [shape: f32[32,64], index: 2, kind: input, shape index: {}]
  %s3 = inlined_call_operand.vmem [shape: f32[1,64], index: 3, kind: input, shape index: {}]
  %s4 = inlined_call_operand.vmem [shape: f32[4,64,64], index: 4, kind: input, shape index: {}]
  %s5 = inlined_call_operand.vmem [shape: f32[4,64], index: 5, kind: input, shape index: {}]
  %s6 = inlined_call_operand.vmem [shape: f32[1,64], index: 6, kind: input, shape index: {}]
  %s7 = inlined_call_operand.<no memory space> [shape: f32[1,1], index: 7, kind: input, shape index: {}]
  %s8 = inlined_call_operand.vmem [shape: f32[5,64], index: 8, kind: input, shape index: {}]
  %s9 = inlined_call_operand.vmem [shape: f32[5,64], index: 9, kind: input, shape index: {}]
  %s10 = inlined_call_operand.vmem [shape: f32[128,64], index: 10, kind: input, shape index: {}]
  %s11 = inlined_call_operand.vmem [shape: f32[1,64], index: 11, kind: input, shape index: {}]
  %s12 = inlined_call_operand.vmem [shape: f32[12,64], index: 12, kind: input, shape index: {}]
  %s13 = inlined_call_operand.vmem [shape: f32[1,64], index: 13, kind: input, shape index: {}]
  %s14 = inlined_call_operand.vmem [shape: f32[64,12], index: 14, kind: input, shape index: {}]
  %s15 = inlined_call_operand.vmem [shape: f32[1,12], index: 15, kind: input, shape index: {}]
  %s16 = inlined_call_operand.vmem [shape: f32[512,64], index: 16, kind: input, shape index: {}]
  %s17 = inlined_call_operand.vmem [shape: f32[1,64], index: 17, kind: input, shape index: {}]
  %s18 = inlined_call_operand.vmem [shape: f32[3,64], index: 18, kind: input, shape index: {}]
  %s19 = inlined_call_operand.<no memory space> [shape: f32[1,1], index: 19, kind: input, shape index: {}]
  %s20 = inlined_call_operand.vmem [shape: f32[24,128], index: 20, kind: output, shape index: {}]
  %s21 = sld [smem:[#allocation0]]
  $region90: #{discriminator_forward.1} parent=0
    _
  %s23 = ssub.s32 1, %s21
  %s24 = scalar_select 0, %s23, %s21
  %v25 = vstv %s7
  %26 = vst [vmem:[#allocation2] sm:$0x1] %v25
  %v27 = vstv %s19
  %28 = vst [vmem:[#allocation3] sm:$0x1] %v27
  // Predicated region
  $region2: #{discriminator_forward.1} parent=0 // pred_check
    _
  $region3: #{discriminator_forward.1} parent=0 // pred_check_branch
    %30 = sbr.rel (0) target = $region5
  $region4: #{discriminator_forward.1} parent=0 // pred_region
    _
  $region5: #{discriminator_forward.1} parent=0 // pred_fallthru
    _
  // Predicated region
  $region6: #{discriminator_forward.1} parent=0 // pred_check
    _
  $region7: #{discriminator_forward.1} parent=0 // pred_check_branch
    %32 = sbr.rel (0) target = $region9
  $region8: #{discriminator_forward.1} parent=0 // pred_region
    _
  $region9: #{discriminator_forward.1} parent=0 // pred_fallthru
    _
  // Predicated region
  $region10: #{discriminator_forward.1} parent=0 // pred_check
    _
  $region11: #{discriminator_forward.1} parent=0 // pred_check_branch
    %34 = sbr.rel (0) target = $region13
  $region12: #{discriminator_forward.1} parent=0 // pred_region
    _
  $region13: #{discriminator_forward.1} parent=0 // pred_fallthru
    _
  // Predicated region
  $region14: #{discriminator_forward.1} parent=0 // pred_check
    _
  $region15: #{discriminator_forward.1} parent=0 // pred_check_branch
    %36 = sbr.rel (0) target = $region17
  $region16: #{discriminator_forward.1} parent=0 // pred_region
    _
  $region17: #{discriminator_forward.1} parent=0 // pred_fallthru
    _
  // Predicated region
  $region18: #{discriminator_forward.1} parent=0 // pred_check
    _
  $region19: #{discriminator_forward.1} parent=0 // pred_check_branch
    %38 = sbr.rel (0) target = $region21
  $region20: #{discriminator_forward.1} parent=0 // pred_region
    _
  $region21: #{discriminator_forward.1} parent=0 // pred_fallthru
    _
  // Predicated region
  $region22: #{discriminator_forward.1} parent=0 // pred_check
    _
  $region23: #{discriminator_forward.1} parent=0 // pred_check_branch
    %40 = sbr.rel (0) target = $region25
  $region24: #{discriminator_forward.1} parent=0 // pred_region
    _
  $region25: #{discriminator_forward.1} parent=0 // pred_fallthru
    _
  // Predicated region
  $region26: #{discriminator_forward.1} parent=0 // pred_check
    _
  $region27: #{discriminator_forward.1} parent=0 // pred_check_branch
    %42 = sbr.rel (0) target = $region29
  $region28: #{discriminator_forward.1} parent=0 // pred_region
    _
  $region29: #{discriminator_forward.1} parent=0 // pred_fallthru
    _
  // Predicated region
  $region30: #{discriminator_forward.1} parent=0 // pred_check
    _
  $region31: #{discriminator_forward.1} parent=0 // pred_check_branch
    %44 = sbr.rel (0) target = $region33
  $region32: #{discriminator_forward.1} parent=0 // pred_region
    _
  $region33: #{discriminator_forward.1} parent=0 // pred_fallthru
    _
  // Predicated region
  $region34: #{discriminator_forward.1} parent=0 // pred_check
    _
  $region35: #{discriminator_forward.1} parent=0 // pred_check_branch
    %46 = sbr.rel (0) target = $region37
  $region36: #{discriminator_forward.1} parent=0 // pred_region
    _
  $region37: #{discriminator_forward.1} parent=0 // pred_fallthru
    _
  // Predicated region
  $region38: #{discriminator_forward.1} parent=0 // pred_check
    _
  $region39: #{discriminator_forward.1} parent=0 // pred_check_branch
    %48 = sbr.rel (0) target = $region41
  $region40: #{discriminator_forward.1} parent=0 // pred_region
    _
  $region41: #{discriminator_forward.1} parent=0 // pred_fallthru
    _
  // Predicated region
  $region42: #{discriminator_forward.1} parent=0 // pred_check
    _
  $region43: #{discriminator_forward.1} parent=0 // pred_check_branch
    %50 = sbr.rel (0) target = $region45
  $region44: #{discriminator_forward.1} parent=0 // pred_region
    _
  $region45: #{discriminator_forward.1} parent=0 // pred_fallthru
    _
  // Predicated region
  $region46: #{discriminator_forward.1} parent=0 // pred_check
    _
  $region47: #{discriminator_forward.1} parent=0 // pred_check_branch
    %52 = sbr.rel (0) target = $region49
  $region48: #{discriminator_forward.1} parent=0 // pred_region
    _
  $region49: #{discriminator_forward.1} parent=0 // pred_fallthru
    _
  // Predicated region
  $region50: #{discriminator_forward.1} parent=0 // pred_check
    _
  $region51: #{discriminator_forward.1} parent=0 // pred_check_branch
    %54 = sbr.rel (0) target = $region53
  $region52: #{discriminator_forward.1} parent=0 // pred_region
    _
  $region53: #{discriminator_forward.1} parent=0 // pred_fallthru
    _
  // Predicated region
  $region54: #{discriminator_forward.1} parent=0 // pred_check
    _
  $region55: #{discriminator_forward.1} parent=0 // pred_check_branch
    %56 = sbr.rel (0) target = $region57
  $region56: #{discriminator_forward.1} parent=0 // pred_region
    _
  $region57: #{discriminator_forward.1} parent=0 // pred_fallthru
    _
  // Predicated region
  $region58: #{discriminator_forward.1} parent=0 // pred_check
    _
  $region59: #{discriminator_forward.1} parent=0 // pred_check_branch
    %58 = sbr.rel (0) target = $region61
  $region60: #{discriminator_forward.1} parent=0 // pred_region
    _
  $region61: #{discriminator_forward.1} parent=0 // pred_fallthru
    _
  // Predicated region
  $region62: #{discriminator_forward.1} parent=0 // pred_check
    _
  $region63: #{discriminator_forward.1} parent=0 // pred_check_branch
    %60 = sbr.rel (0) target = $region65
  $region64: #{discriminator_forward.1} parent=0 // pred_region
    _
  $region65: #{discriminator_forward.1} parent=0 // pred_fallthru
    _
  // Predicated region
  $region66: #{discriminator_forward.1} parent=0 // pred_check
    _
  $region67: #{discriminator_forward.1} parent=0 // pred_check_branch
    %62 = sbr.rel (0) target = $region69
  $region68: #{discriminator_forward.1} parent=0 // pred_region
    _
  $region69: #{discriminator_forward.1} parent=0 // pred_fallthru
    _
  // Predicated region
  $region70: #{discriminator_forward.1} parent=0 // pred_check
    _
  $region71: #{discriminator_forward.1} parent=0 // pred_check_branch
    %64 = sbr.rel (0) target = $region73
  $region72: #{discriminator_forward.1} parent=0 // pred_region
    _
  $region73: #{discriminator_forward.1} parent=0 // pred_fallthru
    _
  // Predicated region
  $region74: #{discriminator_forward.1} parent=0 // pred_check
    _
  $region75: #{discriminator_forward.1} parent=0 // pred_check_branch
    %66 = sbr.rel (0) target = $region77
  $region76: #{discriminator_forward.1} parent=0 // pred_region
    _
  $region77: #{discriminator_forward.1} parent=0 // pred_fallthru
    _
  // Predicated region
  $region78: #{discriminator_forward.1} parent=0 // pred_check
    _
  $region79: #{discriminator_forward.1} parent=0 // pred_check_branch
    %68 = sbr.rel (0) target = $region81
  $region80: #{discriminator_forward.1} parent=0 // pred_region
    _
  $region81: #{discriminator_forward.1} parent=0 // pred_fallthru
    _
  %v69 = vld [vmem:[%s8] sm:$0x1f]
  %v70 = vld [vmem:[%s9] sm:$0x1f]
  %v71 = vlaneseq
  %v72 = vshrl.u32 %v71, 7
  %v73 = vadd.s32 %v72, 8
  %v74 = vadd.s32 %v72, 16
  %vm75 = vcmp.lt.s32.totalorder %v72, 18
  %vm76 = vcmp.lt.s32.totalorder %v73, 18
  %vm77 = vcmp.lt.s32.totalorder %v74, 18
  %v78 = vsel %vm75, 1, 0
  %v79 = vsel %vm76, 1, 0
  %v80 = vsel %vm77, 1, 0
  %v81 = vcvt.s32.f32 %v78
  %v82 = vcvt.s32.f32 %v79
  %v83 = vcvt.s32.f32 %v80
  %v84 = vld [vmem:[%s0] sm:$0xff]
  %v85 = vld [vmem:[%s0 + $0x8] sm:$0xff]
  %v86 = vld [vmem:[%s0 + $0x10] sm:$0xff]
  %v87 = vld [vmem:[%s4] sm:$0xff]
  %v88 = vld [vmem:[%s4 + $0x8] sm:$0xff]
  %v89 = vld [vmem:[%s4 + $0x10] sm:$0xff]
  %v90 = vld [vmem:[%s4 + $0x18] sm:$0xff]
  %v91 = vld [vmem:[%s4 + $0x20] sm:$0xff]
  %v92 = vld [vmem:[%s4 + $0x28] sm:$0xff]
  %v93 = vld [vmem:[%s4 + $0x30] sm:$0xff]
  %v94 = vld [vmem:[%s4 + $0x38] sm:$0xff]
  %v95 = vld [vmem:[%s4 + $0x40] sm:$0xff]
  %v96 = vld [vmem:[%s4 + $0x48] sm:$0xff]
  %v97 = vld [vmem:[%s4 + $0x50] sm:$0xff]
  %v98 = vld [vmem:[%s4 + $0x58] sm:$0xff]
  %v99 = vld [vmem:[%s4 + $0x60] sm:$0xff]
  %v100 = vld [vmem:[%s4 + $0x68] sm:$0xff]
  %v101 = vld [vmem:[%s4 + $0x70] sm:$0xff]
  %v102 = vld [vmem:[%s4 + $0x78] sm:$0xff]
  %v103 = vld [vmem:[%s4 + $0x80] sm:$0xff]
  %v104 = vld [vmem:[%s4 + $0x88] sm:$0xff]
  %v105 = vld [vmem:[%s4 + $0x90] sm:$0xff]
  %v106 = vld [vmem:[%s4 + $0x98] sm:$0xff]
  %v107 = vld [vmem:[%s4 + $0xa0] sm:$0xff]
  %v108 = vld [vmem:[%s4 + $0xa8] sm:$0xff]
  %v109 = vld [vmem:[%s4 + $0xb0] sm:$0xff]
  %v110 = vld [vmem:[%s4 + $0xb8] sm:$0xff]
  %v111 = vld [vmem:[%s4 + $0xc0] sm:$0xff]
  %v112 = vld [vmem:[%s4 + $0xc8] sm:$0xff]
  %v113 = vld [vmem:[%s4 + $0xd0] sm:$0xff]
  %v114 = vld [vmem:[%s4 + $0xd8] sm:$0xff]
  %v115 = vld [vmem:[%s4 + $0xe0] sm:$0xff]
  %v116 = vld [vmem:[%s4 + $0xe8] sm:$0xff]
  %v117 = vld [vmem:[%s4 + $0xf0] sm:$0xff]
  %v118 = vld [vmem:[%s4 + $0xf8] sm:$0xff]
  %v119 = vld [vmem:[%s5] sm:$0xf]
  %v120 = vld [vmem:[%s2] sm:$0xff]
  %v121 = vld [vmem:[%s2 + $0x8] sm:$0xff]
  %v122 = vld [vmem:[%s2 + $0x10] sm:$0xff]
  %v123 = vld [vmem:[%s2 + $0x18] sm:$0xff]
  %v124 = vld [vmem:[%s3] sm:$0x1]
  %v126 = vperm.slane %v124, 0
  %vm128 = vcmask 261120
  %v130 = vsel %vm128, %v84, 0
  %v133 = vsel %vm128, %v85, 0
  %v136 = vsel %vm128, %v86, 0
  %138 = vmatpush.msra.mxu0 0.0
  %139 = vmatpush.msra.mxu0 0.0
  %140 = vmatpush.msra.mxu0 0.0
  %141 = vmatpush.msra.mxu0 0.0
  %142 = vmatpush.msra.mxu0 0.0
  %143 = vmatpush.msra.mxu0 0.0
  %144 = vmatpush.msra.mxu0 0.0
  %145 = vmatpush.msra.mxu0 0.0
  %146 = vmatpush.msra.mxu0 0.0
  %147 = vmatpush.msra.mxu0 0.0
  %148 = vmatpush.msra.mxu0 0.0
  %149 = vmatpush.msra.mxu0 0.0
  %150 = vmatpush.msra.mxu0 %v123
  %151 = vmatpush.msra.mxu0 %v122
  %152 = vmatpush.msra.mxu0 %v121
  %153 = vmatpush.msra.mxu0 %v120
  %154 = vmatmul.f32.gmra.mxu0 %v130
  %v155 = vpop.f32.mrf.mxu0
  %v156 = vadd.f32 %v126, %v155
  %157 = vmatmul.f32.gmra.mxu0 %v133
  %v158 = vpop.f32.mrf.mxu0
  %v159 = vadd.f32 %v126, %v158
  %160 = vmatmul.f32.gmra.mxu0 %v136
  %v161 = vpop.f32.mrf.mxu0
  %v162 = vadd.f32 %v126, %v161
  %163 = vdwg.mxu0
  %v164 = vmul.f32 %v156, %v81
  %v165 = vmul.f32 %v159, %v82
  %v166 = vmul.f32 %v162, %v83
  %vm167 = vcmask 523264
  %v168 = vsel %vm167, %v164, 0.0
  %v169 = vsel %vm167, %v165, 0.0
  %v170 = vadd.f32 %v168, %v169
  %v171 = vsel %vm167, %v166, 0.0
  %v172 = vadd.f32 %v170, %v171
  %v173 = vrot.slane %v172, 4
  %v174 = vadd.f32 %v172, %v173
  %v175 = vrot.slane %v174, 2
  %v176 = vadd.f32 %v174, %v175
  %v177 = vrot.slane %v176, 1
  %v178 = vadd.f32 %v176, %v177
  %v179 = vmul.f32 %v178, 0.055555556
  %v180 = vmul.f32 %v164, %v156
  %v181 = vmul.f32 %v165, %v159
  %v182 = vmul.f32 %v166, %v162
  %v183 = vsel %vm167, %v180, 0.0
  %v184 = vsel %vm167, %v181, 0.0
  %v185 = vadd.f32 %v183, %v184
  %v186 = vsel %vm167, %v182, 0.0
  %v187 = vadd.f32 %v185, %v186
  %v188 = vrot.slane %v187, 4
  %v189 = vadd.f32 %v187, %v188
  %v190 = vrot.slane %v189, 2
  %v191 = vadd.f32 %v189, %v190
  %v192 = vrot.slane %v191, 1
  %v193 = vadd.f32 %v191, %v192
  %v194 = vmul.f32 %v193, 0.055555556
  %v195 = vmul.f32 %v179, %v179
  %v196 = vsub.f32 %v194, %v195
  %v197 = vsub.f32 %v156, %v179
  %v198 = vsub.f32 %v159, %v179
  %v199 = vsub.f32 %v162, %v179
  %v200 = vadd.f32 %v196, 1e-05
  %v201 = vrsqrt.pop %v200
  %v202 = vmul.f32 %v201, %v200
  %v203 = vmul.f32 %v202, %v201
  %v204 = vmul.f32 0.5, %v203
  %v205 = vsub.f32 1.5, %v204
  %v206 = vmul.f32 %v201, %v205
  %vm207 = vweird.f32 %v200
  %vm208 = vweird.f32 %v201
  %vm209 = vmor %vm207, %vm208
  %v210 = vsel %vm209, %v201, %v206
  %v211 = vmul.f32 %v197, %v210
  %v212 = vmul.f32 %v198, %v210
  %v213 = vmul.f32 %v199, %v210
  %v214 = vperm.slane %v69, 0
  %v215 = vmul.f32 %v211, %v214
  %v216 = vmul.f32 %v212, %v214
  %v217 = vmul.f32 %v213, %v214
  %v218 = vperm.slane %v70, 0
  %v219 = vadd.f32 %v215, %v218
  %v220 = vadd.f32 %v216, %v218
  %v221 = vadd.f32 %v217, %v218
  %vm222 = vcmp.ge.f32.partialorder %v219, 0.0
  %vm223 = vcmp.ge.f32.partialorder %v220, 0.0
  %vm224 = vcmp.ge.f32.partialorder %v221, 0.0
  %v225 = vmul.f32 %v219, 0.2
  %v226 = vmul.f32 %v220, 0.2
  %v227 = vmul.f32 %v221, 0.2
  %v228 = vsel %vm222, %v219, %v225
  %v229 = vsel %vm223, %v220, %v226
  %v230 = vsel %vm224, %v221, %v227
  %v231 = vperm.slane %v119, 0
  %v233 = vsel %vm167, %v228, 0
  %v236 = vsel %vm167, %v229, 0
  %v239 = vsel %vm167, %v230, 0
  %241 = vmatpush.msra.mxu0 0.0
  %242 = vmatpush.msra.mxu0 0.0
  %243 = vmatpush.msra.mxu0 0.0
  %244 = vmatpush.msra.mxu0 0.0
  %245 = vmatpush.msra.mxu0 0.0
  %246 = vmatpush.msra.mxu0 0.0
  %247 = vmatpush.msra.mxu0 0.0
  %248 = vmatpush.msra.mxu0 0.0
  %249 = vmatpush.msra.mxu0 %v94
  %250 = vmatpush.msra.mxu0 %v93
  %251 = vmatpush.msra.mxu0 %v92
  %252 = vmatpush.msra.mxu0 %v91
  %253 = vmatpush.msra.mxu0 %v90
  %254 = vmatpush.msra.mxu0 %v89
  %255 = vmatpush.msra.mxu0 %v88
  %256 = vmatpush.msra.mxu0 %v87
  %257 = vmatmul.f32.gmra.mxu0 %v233
  %v258 = vpop.f32.mrf.mxu0
  %v259 = vadd.f32 %v231, %v258
  %260 = vmatmul.f32.gmra.mxu0 %v236
  %v261 = vpop.f32.mrf.mxu0
  %v262 = vadd.f32 %v231, %v261
  %263 = vmatmul.f32.gmra.mxu0 %v239
  %v264 = vpop.f32.mrf.mxu0
  %v265 = vadd.f32 %v231, %v264
  %266 = vdwg.mxu0
  %v267 = vmul.f32 %v259, %v81
  %v268 = vmul.f32 %v262, %v82
  %v269 = vmul.f32 %v265, %v83
  %v270 = vsel %vm167, %v267, 0.0
  %v271 = vsel %vm167, %v268, 0.0
  %v272 = vadd.f32 %v270, %v271
  %v273 = vsel %vm167, %v269, 0.0
  %v274 = vadd.f32 %v272, %v273
  %v275 = vrot.slane %v274, 4
  %v276 = vadd.f32 %v274, %v275
  %v277 = vrot.slane %v276, 2
  %v278 = vadd.f32 %v276, %v277
  %v279 = vrot.slane %v278, 1
  %v280 = vadd.f32 %v278, %v279
  %v281 = vmul.f32 %v280, 0.055555556
  %v282 = vmul.f32 %v267, %v259
  %v283 = vmul.f32 %v268, %v262
  %v284 = vmul.f32 %v269, %v265
  %v285 = vsel %vm167, %v282, 0.0
  %v286 = vsel %vm167, %v283, 0.0
  %v287 = vadd.f32 %v285, %v286
  %v288 = vsel %vm167, %v284, 0.0
  %v289 = vadd.f32 %v287, %v288
  %v290 = vrot.slane %v289, 4
  %v291 = vadd.f32 %v289, %v290
  %v292 = vrot.slane %v291, 2
  %v293 = vadd.f32 %v291, %v292
  %v294 = vrot.slane %v293, 1
  %v295 = vadd.f32 %v293, %v294
  %v296 = vmul.f32 %v295, 0.055555556
  %v297 = vmul.f32 %v281, %v281
  %v298 = vsub.f32 %v296, %v297
  %v299 = vsub.f32 %v259, %v281
  %v300 = vsub.f32 %v262, %v281
  %v301 = vsub.f32 %v265, %v281
  %v302 = vadd.f32 %v298, 1e-05
  %v303 = vrsqrt.pop %v302
  %v304 = vmul.f32 %v303, %v302
  %v305 = vmul.f32 %v304, %v303
  %v306 = vmul.f32 0.5, %v305
  %v307 = vsub.f32 1.5, %v306
  %v308 = vmul.f32 %v303, %v307
  %vm309 = vweird.f32 %v302
  %vm310 = vweird.f32 %v303
  %vm311 = vmor %vm309, %vm310
  %v312 = vsel %vm311, %v303, %v308
  %v313 = vmul.f32 %v299, %v312
  %v314 = vmul.f32 %v300, %v312
  %v315 = vmul.f32 %v301, %v312
  %v316 = vperm.slane %v69, 1
  %v317 = vmul.f32 %v313, %v316
  %v318 = vmul.f32 %v314, %v316
  %v319 = vmul.f32 %v315, %v316
  %v320 = vperm.slane %v70, 1
  %v321 = vadd.f32 %v317, %v320
  %v322 = vadd.f32 %v318, %v320
  %v323 = vadd.f32 %v319, %v320
  %vm324 = vcmp.ge.f32.partialorder %v321, 0.0
  %vm325 = vcmp.ge.f32.partialorder %v322, 0.0
  %vm326 = vcmp.ge.f32.partialorder %v323, 0.0
  %v327 = vmul.f32 %v321, 0.2
  %v328 = vmul.f32 %v322, 0.2
  %v329 = vmul.f32 %v323, 0.2
  %v330 = vsel %vm324, %v321, %v327
  %v331 = vsel %vm325, %v322, %v328
  %v332 = vsel %vm326, %v323, %v329
  %v333 = vperm.slane %v119, 1
  %v335 = vsel %vm167, %v330, 0
  %v338 = vsel %vm167, %v331, 0
  %v341 = vsel %vm167, %v332, 0
  %343 = vmatpush.msra.mxu0 0.0
  %344 = vmatpush.msra.mxu0 0.0
  %345 = vmatpush.msra.mxu0 0.0
  %346 = vmatpush.msra.mxu0 0.0
  %347 = vmatpush.msra.mxu0 0.0
  %348 = vmatpush.msra.mxu0 0.0
  %349 = vmatpush.msra.mxu0 0.0
  %350 = vmatpush.msra.mxu0 0.0
  %351 = vmatpush.msra.mxu0 %v102
  %352 = vmatpush.msra.mxu0 %v101
  %353 = vmatpush.msra.mxu0 %v100
  %354 = vmatpush.msra.mxu0 %v99
  %355 = vmatpush.msra.mxu0 %v98
  %356 = vmatpush.msra.mxu0 %v97
  %357 = vmatpush.msra.mxu0 %v96
  %358 = vmatpush.msra.mxu0 %v95
  %359 = vmatmul.f32.gmra.mxu0 %v335
  %v360 = vpop.f32.mrf.mxu0
  %v361 = vadd.f32 %v333, %v360
  %362 = vmatmul.f32.gmra.mxu0 %v338
  %v363 = vpop.f32.mrf.mxu0
  %v364 = vadd.f32 %v333, %v363
  %365 = vmatmul.f32.gmra.mxu0 %v341
  %v366 = vpop.f32.mrf.mxu0
  %v367 = vadd.f32 %v333, %v366
  %368 = vdwg.mxu0
  %v369 = vmul.f32 %v361, %v81
  %v370 = vmul.f32 %v364, %v82
  %v371 = vmul.f32 %v367, %v83
  %v372 = vsel %vm167, %v369, 0.0
  %v373 = vsel %vm167, %v370, 0.0
  %v374 = vadd.f32 %v372, %v373
  %v375 = vsel %vm167, %v371, 0.0
  %v376 = vadd.f32 %v374, %v375
  %v377 = vrot.slane %v376, 4
  %v378 = vadd.f32 %v376, %v377
  %v379 = vrot.slane %v378, 2
  %v380 = vadd.f32 %v378, %v379
  %v381 = vrot.slane %v380, 1
  %v382 = vadd.f32 %v380, %v381
  %v383 = vmul.f32 %v382, 0.055555556
  %v384 = vmul.f32 %v369, %v361
  %v385 = vmul.f32 %v370, %v364
  %v386 = vmul.f32 %v371, %v367
  %v387 = vsel %vm167, %v384, 0.0
  %v388 = vsel %vm167, %v385, 0.0
  %v389 = vadd.f32 %v387, %v388
  %v390 = vsel %vm167, %v386, 0.0
  %v391 = vadd.f32 %v389, %v390
  %v392 = vrot.slane %v391, 4
  %v393 = vadd.f32 %v391, %v392
  %v394 = vrot.slane %v393, 2
  %v395 = vadd.f32 %v393, %v394
  %v396 = vrot.slane %v395, 1
  %v397 = vadd.f32 %v395, %v396
  %v398 = vmul.f32 %v397, 0.055555556
  %v399 = vmul.f32 %v383, %v383
  %v400 = vsub.f32 %v398, %v399
  %v401 = vsub.f32 %v361, %v383
  %v402 = vsub.f32 %v364, %v383
  %v403 = vsub.f32 %v367, %v383
  %v404 = vadd.f32 %v400, 1e-05
  %v405 = vrsqrt.pop %v404
  %v406 = vmul.f32 %v405, %v404
  %v407 = vmul.f32 %v406, %v405
  %v408 = vmul.f32 0.5, %v407
  %v409 = vsub.f32 1.5, %v408
  %v410 = vmul.f32 %v405, %v409
  %vm411 = vweird.f32 %v404
  %vm412 = vweird.f32 %v405
  %vm413 = vmor %vm411, %vm412
  %v414 = vsel %vm413, %v405, %v410
  %v415 = vmul.f32 %v401, %v414
  %v416 = vmul.f32 %v402, %v414
  %v417 = vmul.f32 %v403, %v414
  %v418 = vperm.slane %v69, 2
  %v419 = vmul.f32 %v415, %v418
  %v420 = vmul.f32 %v416, %v418
  %v421 = vmul.f32 %v417, %v418
  %v422 = vperm.slane %v70, 2
  %v423 = vadd.f32 %v419, %v422
  %v424 = vadd.f32 %v420, %v422
  %v425 = vadd.f32 %v421, %v422
  %vm426 = vcmp.ge.f32.partialorder %v423, 0.0
  %vm427 = vcmp.ge.f32.partialorder %v424, 0.0
  %vm428 = vcmp.ge.f32.partialorder %v425, 0.0
  %v429 = vmul.f32 %v423, 0.2
  %v430 = vmul.f32 %v424, 0.2
  %v431 = vmul.f32 %v425, 0.2
  %v432 = vsel %vm426, %v423, %v429
  %v433 = vsel %vm427, %v424, %v430
  %v434 = vsel %vm428, %v425, %v431
  %v435 = vperm.slane %v119, 2
  %v437 = vsel %vm167, %v432, 0
  %v440 = vsel %vm167, %v433, 0
  %v443 = vsel %vm167, %v434, 0
  %445 = vmatpush.msra.mxu0 0.0
  %446 = vmatpush.msra.mxu0 0.0
  %447 = vmatpush.msra.mxu0 0.0
  %448 = vmatpush.msra.mxu0 0.0
  %449 = vmatpush.msra.mxu0 0.0
  %450 = vmatpush.msra.mxu0 0.0
  %451 = vmatpush.msra.mxu0 0.0
  %452 = vmatpush.msra.mxu0 0.0
  %453 = vmatpush.msra.mxu0 %v110
  %454 = vmatpush.msra.mxu0 %v109
  %455 = vmatpush.msra.mxu0 %v108
  %456 = vmatpush.msra.mxu0 %v107
  %457 = vmatpush.msra.mxu0 %v106
  %458 = vmatpush.msra.mxu0 %v105
  %459 = vmatpush.msra.mxu0 %v104
  %460 = vmatpush.msra.mxu0 %v103
  %461 = vmatmul.f32.gmra.mxu0 %v437
  %v462 = vpop.f32.mrf.mxu0
  %v463 = vadd.f32 %v435, %v462
  %464 = vmatmul.f32.gmra.mxu0 %v440
  %v465 = vpop.f32.mrf.mxu0
  %v466 = vadd.f32 %v435, %v465
  %467 = vmatmul.f32.gmra.mxu0 %v443
  %v468 = vpop.f32.mrf.mxu0
  %v469 = vadd.f32 %v435, %v468
  %470 = vdwg.mxu0
  %v471 = vmul.f32 %v463, %v81
  %v472 = vmul.f32 %v466, %v82
  %v473 = vmul.f32 %v469, %v83
  %v474 = vsel %vm167, %v471, 0.0
  %v475 = vsel %vm167, %v472, 0.0
  %v476 = vadd.f32 %v474, %v475
  %v477 = vsel %vm167, %v473, 0.0
  %v478 = vadd.f32 %v476, %v477
  %v479 = vrot.slane %v478, 4
  %v480 = vadd.f32 %v478, %v479
  %v481 = vrot.slane %v480, 2
  %v482 = vadd.f32 %v480, %v481
  %v483 = vrot.slane %v482, 1
  %v484 = vadd.f32 %v482, %v483
  %v485 = vmul.f32 %v484, 0.055555556
  %v486 = vmul.f32 %v471, %v463
  %v487 = vmul.f32 %v472, %v466
  %v488 = vmul.f32 %v473, %v469
  %v489 = vsel %vm167, %v486, 0.0
  %v490 = vsel %vm167, %v487, 0.0
  %v491 = vadd.f32 %v489, %v490
  %v492 = vsel %vm167, %v488, 0.0
  %v493 = vadd.f32 %v491, %v492
  %v494 = vrot.slane %v493, 4
  %v495 = vadd.f32 %v493, %v494
  %v496 = vrot.slane %v495, 2
  %v497 = vadd.f32 %v495, %v496
  %v498 = vrot.slane %v497, 1
  %v499 = vadd.f32 %v497, %v498
  %v500 = vmul.f32 %v499, 0.055555556
  %v501 = vmul.f32 %v485, %v485
  %v502 = vsub.f32 %v500, %v501
  %v503 = vsub.f32 %v463, %v485
  %v504 = vsub.f32 %v466, %v485
  %v505 = vsub.f32 %v469, %v485
  %v506 = vadd.f32 %v502, 1e-05
  %v507 = vrsqrt.pop %v506
  %v508 = vmul.f32 %v507, %v506
  %v509 = vmul.f32 %v508, %v507
  %v510 = vmul.f32 0.5, %v509
  %v511 = vsub.f32 1.5, %v510
  %v512 = vmul.f32 %v507, %v511
  %vm513 = vweird.f32 %v506
  %vm514 = vweird.f32 %v507
  %vm515 = vmor %vm513, %vm514
  %v516 = vsel %vm515, %v507, %v512
  %v517 = vmul.f32 %v503, %v516
  %v518 = vmul.f32 %v504, %v516
  %v519 = vmul.f32 %v505, %v516
  %v520 = vperm.slane %v69, 3
  %v521 = vmul.f32 %v517, %v520
  %v522 = vmul.f32 %v518, %v520
  %v523 = vmul.f32 %v519, %v520
  %v524 = vperm.slane %v70, 3
  %v525 = vadd.f32 %v521, %v524
  %v526 = vadd.f32 %v522, %v524
  %v527 = vadd.f32 %v523, %v524
  %vm528 = vcmp.ge.f32.partialorder %v525, 0.0
  %vm529 = vcmp.ge.f32.partialorder %v526, 0.0
  %vm530 = vcmp.ge.f32.partialorder %v527, 0.0
  %v531 = vmul.f32 %v525, 0.2
  %v532 = vmul.f32 %v526, 0.2
  %v533 = vmul.f32 %v527, 0.2
  %v534 = vsel %vm528, %v525, %v531
  %v535 = vsel %vm529, %v526, %v532
  %v536 = vsel %vm530, %v527, %v533
  %v537 = vperm.slane %v119, 3
  %v539 = vsel %vm167, %v534, 0
  %v542 = vsel %vm167, %v535, 0
  %v545 = vsel %vm167, %v536, 0
  %547 = vmatpush.msra.mxu0 0.0
  %548 = vmatpush.msra.mxu0 0.0
  %549 = vmatpush.msra.mxu0 0.0
  %550 = vmatpush.msra.mxu0 0.0
  %551 = vmatpush.msra.mxu0 0.0
  %552 = vmatpush.msra.mxu0 0.0
  %553 = vmatpush.msra.mxu0 0.0
  %554 = vmatpush.msra.mxu0 0.0
  %555 = vmatpush.msra.mxu0 %v118
  %556 = vmatpush.msra.mxu0 %v117
  %557 = vmatpush.msra.mxu0 %v116
  %558 = vmatpush.msra.mxu0 %v115
  %559 = vmatpush.msra.mxu0 %v114
  %560 = vmatpush.msra.mxu0 %v113
  %561 = vmatpush.msra.mxu0 %v112
  %562 = vmatpush.msra.mxu0 %v111
  %563 = vmatmul.f32.gmra.mxu0 %v539
  %v564 = vpop.f32.mrf.mxu0
  %v565 = vadd.f32 %v537, %v564
  %566 = vmatmul.f32.gmra.mxu0 %v542
  %v567 = vpop.f32.mrf.mxu0
  %v568 = vadd.f32 %v537, %v567
  %569 = vmatmul.f32.gmra.mxu0 %v545
  %v570 = vpop.f32.mrf.mxu0
  %v571 = vadd.f32 %v537, %v570
  %572 = vdwg.mxu0
  %v573 = vmul.f32 %v565, %v81
  %v574 = vmul.f32 %v568, %v82
  %v575 = vmul.f32 %v571, %v83
  %v576 = vsel %vm167, %v573, 0.0
  %v577 = vsel %vm167, %v574, 0.0
  %v578 = vadd.f32 %v576, %v577
  %v579 = vsel %vm167, %v575, 0.0
  %v580 = vadd.f32 %v578, %v579
  %v581 = vrot.slane %v580, 4
  %v582 = vadd.f32 %v580, %v581
  %v583 = vrot.slane %v582, 2
  %v584 = vadd.f32 %v582, %v583
  %v585 = vrot.slane %v584, 1
  %v586 = vadd.f32 %v584, %v585
  %v587 = vmul.f32 %v586, 0.055555556
  %v588 = vmul.f32 %v573, %v565
  %v589 = vmul.f32 %v574, %v568
  %v590 = vmul.f32 %v575, %v571
  %v591 = vsel %vm167, %v588, 0.0
  %v592 = vsel %vm167, %v589, 0.0
  %v593 = vadd.f32 %v591, %v592
  %v594 = vsel %vm167, %v590, 0.0
  %v595 = vadd.f32 %v593, %v594
  %v596 = vrot.slane %v595, 4
  %v597 = vadd.f32 %v595, %v596
  %v598 = vrot.slane %v597, 2
  %v599 = vadd.f32 %v597, %v598
  %v600 = vrot.slane %v599, 1
  %v601 = vadd.f32 %v599, %v600
  %v602 = vmul.f32 %v601, 0.055555556
  %v603 = vmul.f32 %v587, %v587
  %v604 = vsub.f32 %v602, %v603
  %v605 = vsub.f32 %v565, %v587
  %v606 = vsub.f32 %v568, %v587
  %v607 = vsub.f32 %v571, %v587
  %v608 = vadd.f32 %v604, 1e-05
  %v609 = vrsqrt.pop %v608
  %v610 = vmul.f32 %v609, %v608
  %v611 = vmul.f32 %v610, %v609
  %v612 = vmul.f32 0.5, %v611
  %v613 = vsub.f32 1.5, %v612
  %v614 = vmul.f32 %v609, %v613
  %vm615 = vweird.f32 %v608
  %vm616 = vweird.f32 %v609
  %vm617 = vmor %vm615, %vm616
  %v618 = vsel %vm617, %v609, %v614
  %v619 = vmul.f32 %v605, %v618
  %v620 = vmul.f32 %v606, %v618
  %v621 = vmul.f32 %v607, %v618
  %v622 = vperm.slane %v69, 4
  %v623 = vmul.f32 %v619, %v622
  %v624 = vmul.f32 %v620, %v622
  %v625 = vmul.f32 %v621, %v622
  %v626 = vperm.slane %v70, 4
  %v627 = vadd.f32 %v623, %v626
  %v628 = vadd.f32 %v624, %v626
  %v629 = vadd.f32 %v625, %v626
  %vm630 = vcmp.ge.f32.partialorder %v627, 0.0
  %vm631 = vcmp.ge.f32.partialorder %v628, 0.0
  %vm632 = vcmp.ge.f32.partialorder %v629, 0.0
  %v633 = vmul.f32 %v627, 0.2
  %v634 = vmul.f32 %v628, 0.2
  %v635 = vmul.f32 %v629, 0.2
  %v636 = vsel %vm630, %v627, %v633
  %v637 = vsel %vm631, %v628, %v634
  %v638 = vsel %vm632, %v629, %v635
  %v639 = vld [vmem:[%s6] sm:$0x1]
  %v641 = vperm.slane %v639, 0
  %v643 = vmul.f32 %v636, %v641
  %v644 = vmul.f32 %v637, %v641
  %v645 = vmul.f32 %v638, %v641
  %v646 = vsel %vm167, %v643, 0.0
  %647 = vadd.xlane.f32.xlu0 %v646
  %v648 = vpop.xlane.xlu0 %647
  %v649 = vsel %vm167, %v644, 0.0
  %650 = vadd.xlane.f32.xlu0 %v649
  %v651 = vpop.xlane.xlu0 %650
  %v652 = vsel %vm167, %v645, 0.0
  %653 = vadd.xlane.f32.xlu0 %v652
  %v654 = vpop.xlane.xlu0 %653
  %v655 = vld [vmem:[#allocation2] sm:$0x1]
  %v657 = vperm.slane %v655, 0
  %v659 = vadd.f32 %v648, %v657
  %v660 = vadd.f32 %v651, %v657
  %v661 = vadd.f32 %v654, %v657
  %vm662 = vcmask 1045504
  %v663 = vrot.slane %v534, 2
  %v664 = vrot.slane %v535, 2
  %v665 = vsel %vm662, %v663, %v664
  %v666 = vrot.slane %v536, 2
  %v667 = vsel %vm662, %v664, %v666
  %668 = vrot.lane.b32.xlu0 %v665, 64
  %v669 = vpop.permute.xlu0 %668
  %670 = vrot.lane.b32.xlu0 %v667, 64
  %v671 = vpop.permute.xlu0 %670
  %v674 = vsel %vm167, %v534, %v669
  %v675 = vsel %vm167, %v535, %v671
  %v676 = vld [vmem:[%s10] sm:$0xff]
  %v677 = vld [vmem:[%s10 + $0x8] sm:$0xff]
  %v678 = vld [vmem:[%s10 + $0x10] sm:$0xff]
  %v679 = vld [vmem:[%s10 + $0x18] sm:$0xff]
  %v680 = vld [vmem:[%s10 + $0x20] sm:$0xff]
  %v681 = vld [vmem:[%s10 + $0x28] sm:$0xff]
  %v682 = vld [vmem:[%s10 + $0x30] sm:$0xff]
  %v683 = vld [vmem:[%s10 + $0x38] sm:$0xff]
  %v684 = vld [vmem:[%s10 + $0x40] sm:$0xff]
  %v685 = vld [vmem:[%s10 + $0x48] sm:$0xff]
  %v686 = vld [vmem:[%s10 + $0x50] sm:$0xff]
  %v687 = vld [vmem:[%s10 + $0x58] sm:$0xff]
  %v688 = vld [vmem:[%s10 + $0x60] sm:$0xff]
  %v689 = vld [vmem:[%s10 + $0x68] sm:$0xff]
  %v690 = vld [vmem:[%s10 + $0x70] sm:$0xff]
  %v691 = vld [vmem:[%s10 + $0x78] sm:$0xff]
  %v692 = vld [vmem:[%s11] sm:$0x1]
  %v694 = vperm.slane %v692, 0
  %696 = vmatpush.msra.mxu0 %v691
  %697 = vmatpush.msra.mxu0 %v690
  %698 = vmatpush.msra.mxu0 %v689
  %699 = vmatpush.msra.mxu0 %v688
  %700 = vmatpush.msra.mxu0 %v687
  %701 = vmatpush.msra.mxu0 %v686
  %702 = vmatpush.msra.mxu0 %v685
  %703 = vmatpush.msra.mxu0 %v684
  %704 = vmatpush.msra.mxu0 %v683
  %705 = vmatpush.msra.mxu0 %v682
  %706 = vmatpush.msra.mxu0 %v681
  %707 = vmatpush.msra.mxu0 %v680
  %708 = vmatpush.msra.mxu0 %v679
  %709 = vmatpush.msra.mxu0 %v678
  %710 = vmatpush.msra.mxu0 %v677
  %711 = vmatpush.msra.mxu0 %v676
  %712 = vmatmul.f32.gmra.mxu0 %v674
  %v713 = vpop.f32.mrf.mxu0
  %v714 = vadd.f32 %v694, %v713
  %715 = vmatmul.f32.gmra.mxu0 %v675
  %v716 = vpop.f32.mrf.mxu0
  %v717 = vadd.f32 %v694, %v716
  %718 = vdwg.mxu0
  %vm719 = vcmp.ge.f32.partialorder %v714, 0.0
  %vm720 = vcmp.ge.f32.partialorder %v717, 0.0
  %v721 = vmul.f32 %v714, 0.2
  %v722 = vmul.f32 %v717, 0.2
  %v723 = vsel %vm719, %v714, %v721
  %v724 = vsel %vm720, %v717, %v722
  %v725 = vld [vmem:[%s1] sm:$0xff]
  %v726 = vld [vmem:[%s1 + $0x8] sm:$0xff]
  %v727 = vld [vmem:[%s12] sm:$0xff]
  %v728 = vld [vmem:[%s12 + $0x8] sm:$0xf]
  %v729 = vld [vmem:[%s13] sm:$0x1]
  %v731 = vperm.slane %v729, 0
  %vm733 = vcmask 97280
  %v735 = vsel %vm733, %v725, 0
  %v738 = vsel %vm733, %v726, 0
  %vm740 = vcmask 1043456
  %v742 = vsel %vm740, %v728, 0
  %744 = vmatpush.msra.mxu0 0.0
  %745 = vmatpush.msra.mxu0 0.0
  %746 = vmatpush.msra.mxu0 0.0
  %747 = vmatpush.msra.mxu0 0.0
  %748 = vmatpush.msra.mxu0 0.0
  %749 = vmatpush.msra.mxu0 0.0
  %750 = vmatpush.msra.mxu0 0.0
  %751 = vmatpush.msra.mxu0 0.0
  %752 = vmatpush.msra.mxu0 0.0
  %753 = vmatpush.msra.mxu0 0.0
  %754 = vmatpush.msra.mxu0 0.0
  %755 = vmatpush.msra.mxu0 0.0
  %756 = vmatpush.msra.mxu0 0.0
  %757 = vmatpush.msra.mxu0 0.0
  %758 = vmatpush.msra.mxu0 %v742
  %759 = vmatpush.msra.mxu0 %v727
  %760 = vmatmul.f32.gmra.mxu0 %v735
  %v761 = vpop.f32.mrf.mxu0
  %v762 = vadd.f32 %v731, %v761
  %763 = vmatmul.f32.gmra.mxu0 %v738
  %v764 = vpop.f32.mrf.mxu0
  %v765 = vadd.f32 %v731, %v764
  %766 = vdwg.mxu0
  %v767 = vld [vmem:[%s14] sm:$0xff]
  %v768 = vld [vmem:[%s14 + $0x8] sm:$0xff]
  %v769 = vld [vmem:[%s14 + $0x10] sm:$0xff]
  %v770 = vld [vmem:[%s14 + $0x18] sm:$0xff]
  %v771 = vld [vmem:[%s14 + $0x20] sm:$0xff]
  %v772 = vld [vmem:[%s14 + $0x28] sm:$0xff]
  %v773 = vld [vmem:[%s14 + $0x30] sm:$0xff]
  %v774 = vld [vmem:[%s14 + $0x38] sm:$0xff]
  %v775 = vld [vmem:[%s15] sm:$0x1]
  %v777 = vperm.slane %v775, 0
  %v780 = vsel %vm167, %v723, 0
  %v783 = vsel %vm167, %v724, 0
  %785 = vmatpush.msra.mxu0 0.0
  %786 = vmatpush.msra.mxu0 0.0
  %787 = vmatpush.msra.mxu0 0.0
  %788 = vmatpush.msra.mxu0 0.0
  %789 = vmatpush.msra.mxu0 0.0
  %790 = vmatpush.msra.mxu0 0.0
  %791 = vmatpush.msra.mxu0 0.0
  %792 = vmatpush.msra.mxu0 0.0
  %793 = vmatpush.msra.mxu0 %v774
  %794 = vmatpush.msra.mxu0 %v773
  %795 = vmatpush.msra.mxu0 %v772
  %796 = vmatpush.msra.mxu0 %v771
  %797 = vmatpush.msra.mxu0 %v770
  %798 = vmatpush.msra.mxu0 %v769
  %799 = vmatpush.msra.mxu0 %v768
  %800 = vmatpush.msra.mxu0 %v767
  %801 = vmatmul.f32.gmra.mxu0 %v780
  %v802 = vpop.f32.mrf.mxu0
  %v803 = vadd.f32 %v777, %v802
  %804 = vmatmul.f32.gmra.mxu0 %v783
  %v805 = vpop.f32.mrf.mxu0
  %v806 = vadd.f32 %v777, %v805
  %807 = vdwg.mxu0
  %808 = vrot.lane.b32.xlu0 %v723, 64
  %v809 = vpop.permute.xlu0 %808
  %810 = vrot.lane.b32.xlu0 %v724, 64
  %v811 = vpop.permute.xlu0 %810
  %v814 = vsel %vm167, %v762, %v809
  %v815 = vsel %vm167, %v765, %v811
  %v817 = vrot.slane %v814, 2
  %v819 = vrot.slane %v814, 4
  %v821 = vrot.slane %v814, 6
  %v824 = vrot.slane %v815, 4
  %v825 = vrot.slane %v815, 6
  %v826 = vrot.slane %v815, 2
  %v827 = vrot.slane %v814, 3
  %v828 = vrot.slane %v817, 3
  %v829 = vrot.slane %v824, 3
  %v830 = vrot.slane %v825, 3
  %v835 = vrot.slane %v826, 6
  %v836 = vrot.slane %v824, 6
  %v837 = vrot.slane %v825, 6
  %v842 = vrot.slane %v817, 6
  %v843 = vrot.slane %v819, 6
  %v844 = vrot.slane %v821, 6
  %v848 = vrot.slane %v814, 1
  %v849 = vrot.slane %v817, 1
  %v850 = vrot.slane %v824, 1
  %v851 = vrot.slane %v825, 1
  %v856 = vrot.slane %v826, 4
  %v857 = vrot.slane %v824, 4
  %v858 = vrot.slane %v825, 4
  %vm863 = vcmask 1040384
  %v864 = vsel %vm863, %v814, %v827
  %v865 = vsel %vm863, %v817, %v828
  %v866 = vsel %vm863, %v819, %v829
  %v867 = vsel %vm863, %v821, %v830
  %vm868 = vcmask 1041408
  %v869 = vsel %vm868, %v864, %v825
  %v870 = vsel %vm868, %v865, %v835
  %v871 = vsel %vm868, %v866, %v836
  %v872 = vsel %vm868, %v867, %v837
  %vm873 = vcmask 1042432
  %v874 = vsel %vm873, %v869, %v821
  %v875 = vsel %vm873, %v870, %v842
  %v876 = vsel %vm873, %v871, %v843
  %v877 = vsel %vm873, %v872, %v844
  %v878 = vsel %vm740, %v874, %v848
  %v879 = vsel %vm740, %v875, %v849
  %v880 = vsel %vm740, %v876, %v850
  %v881 = vsel %vm740, %v877, %v851
  %vm882 = vcmask 1044480
  %v883 = vsel %vm882, %v878, %v824
  %v884 = vsel %vm882, %v879, %v856
  %v885 = vsel %vm882, %v880, %v857
  %v886 = vsel %vm882, %v881, %v858
  %v887 = vld [vmem:[%s16] sm:$0xff]
  %v888 = vld [vmem:[%s16 + $0x8] sm:$0xff]
  %v889 = vld [vmem:[%s16 + $0x10] sm:$0xff]
  %v890 = vld [vmem:[%s16 + $0x18] sm:$0xff]
  %v891 = vld [vmem:[%s16 + $0x20] sm:$0xff]
  %v892 = vld [vmem:[%s16 + $0x28] sm:$0xff]
  %v893 = vld [vmem:[%s16 + $0x30] sm:$0xff]
  %v894 = vld [vmem:[%s16 + $0x38] sm:$0xff]
  %v895 = vld [vmem:[%s16 + $0x40] sm:$0xff]
  %v896 = vld [vmem:[%s16 + $0x48] sm:$0xff]
  %v897 = vld [vmem:[%s16 + $0x50] sm:$0xff]
  %v898 = vld [vmem:[%s16 + $0x58] sm:$0xff]
  %v899 = vld [vmem:[%s16 + $0x60] sm:$0xff]
  %v900 = vld [vmem:[%s16 + $0x68] sm:$0xff]
  %v901 = vld [vmem:[%s16 + $0x70] sm:$0xff]
  %v902 = vld [vmem:[%s16 + $0x78] sm:$0xff]
  %v903 = vld [vmem:[%s16 + $0x80] sm:$0xff]
  %v904 = vld [vmem:[%s16 + $0x88] sm:$0xff]
  %v905 = vld [vmem:[%s16 + $0x90] sm:$0xff]
  %v906 = vld [vmem:[%s16 + $0x98] sm:$0xff]
  %v907 = vld [vmem:[%s16 + $0xa0] sm:$0xff]
  %v908 = vld [vmem:[%s16 + $0xa8] sm:$0xff]
  %v909 = vld [vmem:[%s16 + $0xb0] sm:$0xff]
  %v910 = vld [vmem:[%s16 + $0xb8] sm:$0xff]
  %v911 = vld [vmem:[%s16 + $0xc0] sm:$0xff]
  %v912 = vld [vmem:[%s16 + $0xc8] sm:$0xff]
  %v913 = vld [vmem:[%s16 + $0xd0] sm:$0xff]
  %v914 = vld [vmem:[%s16 + $0xd8] sm:$0xff]
  %v915 = vld [vmem:[%s16 + $0xe0] sm:$0xff]
  %v916 = vld [vmem:[%s16 + $0xe8] sm:$0xff]
  %v917 = vld [vmem:[%s16 + $0xf0] sm:$0xff]
  %v918 = vld [vmem:[%s16 + $0xf8] sm:$0xff]
  %v919 = vld [vmem:[%s16 + $0x100] sm:$0xff]
  %v920 = vld [vmem:[%s16 + $0x108] sm:$0xff]
  %v921 = vld [vmem:[%s16 + $0x110] sm:$0xff]
  %v922 = vld [vmem:[%s16 + $0x118] sm:$0xff]
  %v923 = vld [vmem:[%s16 + $0x120] sm:$0xff]
  %v924 = vld [vmem:[%s16 + $0x128] sm:$0xff]
  %v925 = vld [vmem:[%s16 + $0x130] sm:$0xff]
  %v926 = vld [vmem:[%s16 + $0x138] sm:$0xff]
  %v927 = vld [vmem:[%s16 + $0x140] sm:$0xff]
  %v928 = vld [vmem:[%s16 + $0x148] sm:$0xff]
  %v929 = vld [vmem:[%s16 + $0x150] sm:$0xff]
  %v930 = vld [vmem:[%s16 + $0x158] sm:$0xff]
  %v931 = vld [vmem:[%s16 + $0x160] sm:$0xff]
  %v932 = vld [vmem:[%s16 + $0x168] sm:$0xff]
  %v933 = vld [vmem:[%s16 + $0x170] sm:$0xff]
  %v934 = vld [vmem:[%s16 + $0x178] sm:$0xff]
  %v935 = vld [vmem:[%s16 + $0x180] sm:$0xff]
  %v936 = vld [vmem:[%s16 + $0x188] sm:$0xff]
  %v937 = vld [vmem:[%s16 + $0x190] sm:$0xff]
  %v938 = vld [vmem:[%s16 + $0x198] sm:$0xff]
  %v939 = vld [vmem:[%s16 + $0x1a0] sm:$0xff]
  %v940 = vld [vmem:[%s16 + $0x1a8] sm:$0xff]
  %v941 = vld [vmem:[%s16 + $0x1b0] sm:$0xff]
  %v942 = vld [vmem:[%s16 + $0x1b8] sm:$0xff]
  %v943 = vld [vmem:[%s16 + $0x1c0] sm:$0xff]
  %v944 = vld [vmem:[%s16 + $0x1c8] sm:$0xff]
  %v945 = vld [vmem:[%s16 + $0x1d0] sm:$0xff]
  %v946 = vld [vmem:[%s16 + $0x1d8] sm:$0xff]
  %v947 = vld [vmem:[%s16 + $0x1e0] sm:$0xff]
  %v948 = vld [vmem:[%s16 + $0x1e8] sm:$0xff]
  %v949 = vld [vmem:[%s16 + $0x1f0] sm:$0xff]
  %v950 = vld [vmem:[%s16 + $0x1f8] sm:$0xff]
  %v951 = vld [vmem:[%s17] sm:$0x1]
  %v953 = vperm.slane %v951, 0
  %955 = vmatpush.msra.mxu0 %v902
  %956 = vmatpush.msra.mxu0 %v901
  %957 = vmatpush.msra.mxu0 %v900
  %958 = vmatpush.msra.mxu0 %v899
  %959 = vmatpush.msra.mxu0 %v898
  %960 = vmatpush.msra.mxu0 %v897
  %961 = vmatpush.msra.mxu0 %v896
  %962 = vmatpush.msra.mxu0 %v895
  %963 = vmatpush.msra.mxu0 %v894
  %964 = vmatpush.msra.mxu0 %v893
  %965 = vmatpush.msra.mxu0 %v892
  %966 = vmatpush.msra.mxu0 %v891
  %967 = vmatpush.msra.mxu0 %v890
  %968 = vmatpush.msra.mxu0 %v889
  %969 = vmatpush.msra.mxu0 %v888
  %970 = vmatpush.msra.mxu0 %v887
  %971 = vmatmul.f32.gmra.mxu0 %v883
  %v972 = vpop.f32.mrf.mxu0
  %v973 = vadd.f32 %v953, %v972
  %974 = vdwg.mxu0
  %975 = vmatpush.msra.mxu0 %v918
  %976 = vmatpush.msra.mxu0 %v917
  %977 = vmatpush.msra.mxu0 %v916
  %978 = vmatpush.msra.mxu0 %v915
  %979 = vmatpush.msra.mxu0 %v914
  %980 = vmatpush.msra.mxu0 %v913
  %981 = vmatpush.msra.mxu0 %v912
  %982 = vmatpush.msra.mxu0 %v911
  %983 = vmatpush.msra.mxu0 %v910
  %984 = vmatpush.msra.mxu0 %v909
  %985 = vmatpush.msra.mxu0 %v908
  %986 = vmatpush.msra.mxu0 %v907
  %987 = vmatpush.msra.mxu0 %v906
  %988 = vmatpush.msra.mxu0 %v905
  %989 = vmatpush.msra.mxu0 %v904
  %990 = vmatpush.msra.mxu0 %v903
  %991 = vmatmul.f32.gmra.mxu0 %v884
  %v992 = vpop.f32.mrf.mxu0
  %v993 = vadd.f32 %v973, %v992
  %994 = vdwg.mxu0
  %995 = vmatpush.msra.mxu0 %v934
  %996 = vmatpush.msra.mxu0 %v933
  %997 = vmatpush.msra.mxu0 %v932
  %998 = vmatpush.msra.mxu0 %v931
  %999 = vmatpush.msra.mxu0 %v930
  %1000 = vmatpush.msra.mxu0 %v929
  %1001 = vmatpush.msra.mxu0 %v928
  %1002 = vmatpush.msra.mxu0 %v927
  %1003 = vmatpush.msra.mxu0 %v926
  %1004 = vmatpush.msra.mxu0 %v925
  %1005 = vmatpush.msra.mxu0 %v924
  %1006 = vmatpush.msra.mxu0 %v923
  %1007 = vmatpush.msra.mxu0 %v922
  %1008 = vmatpush.msra.mxu0 %v921
  %1009 = vmatpush.msra.mxu0 %v920
  %1010 = vmatpush.msra.mxu0 %v919
  %1011 = vmatmul.f32.gmra.mxu0 %v885
  %v1012 = vpop.f32.mrf.mxu0
  %v1013 = vadd.f32 %v993, %v1012
  %1014 = vdwg.mxu0
  %1015 = vmatpush.msra.mxu0 %v950
  %1016 = vmatpush.msra.mxu0 %v949
  %1017 = vmatpush.msra.mxu0 %v948
  %1018 = vmatpush.msra.mxu0 %v947
  %1019 = vmatpush.msra.mxu0 %v946
  %1020 = vmatpush.msra.mxu0 %v945
  %1021 = vmatpush.msra.mxu0 %v944
  %1022 = vmatpush.msra.mxu0 %v943
  %1023 = vmatpush.msra.mxu0 %v942
  %1024 = vmatpush.msra.mxu0 %v941
  %1025 = vmatpush.msra.mxu0 %v940
  %1026 = vmatpush.msra.mxu0 %v939
  %1027 = vmatpush.msra.mxu0 %v938
  %1028 = vmatpush.msra.mxu0 %v937
  %1029 = vmatpush.msra.mxu0 %v936
  %1030 = vmatpush.msra.mxu0 %v935
  %1031 = vmatmul.f32.gmra.mxu0 %v886
  %v1032 = vpop.f32.mrf.mxu0
  %v1033 = vadd.f32 %v1013, %v1032
  %1034 = vdwg.mxu0
  %vm1035 = vcmp.ge.f32.partialorder %v1033, 0.0
  %v1036 = vmul.f32 %v1033, 0.2
  %v1037 = vsel %vm1035, %v1033, %v1036
  %v1038 = vld [vmem:[%s18] sm:$0x7]
  %v1040 = vrot.slane %v1038, 5
  %v1042 = vsel %vm873, %v1038, %v1040
  %v1043 = vmul.f32 %v1037, %v1042
  %vm1044 = vcmask 521216
  %v1045 = vsel %vm1044, %v1043, 0.0
  %1046 = vadd.xlane.f32.xlu0 %v1045
  %v1047 = vpop.xlane.xlu0 %1046
  %v1048 = vsel %vm873, %v1047, 0.0
  %v1049 = vrot.slane %v1048, 4
  %v1050 = vadd.f32 %v1048, %v1049
  %v1051 = vrot.slane %v1050, 2
  %v1052 = vadd.f32 %v1050, %v1051
  %v1053 = vrot.slane %v1052, 1
  %v1054 = vadd.f32 %v1052, %v1053
  %v1056 = vrot.slane %v1047, 3
  %v1058 = vsel %vm873, %v1056, 0.0
  %v1059 = vrot.slane %v1058, 4
  %v1060 = vadd.f32 %v1058, %v1059
  %v1061 = vrot.slane %v1060, 2
  %v1062 = vadd.f32 %v1060, %v1061
  %v1063 = vrot.slane %v1062, 1
  %v1064 = vadd.f32 %v1062, %v1063
  %v1065 = vsel %vm863, %v1054, %v1064
  %v1066 = vld [vmem:[#allocation3] sm:$0x1]
  %v1068 = vperm.slane %v1066, 0
  %v1070 = vadd.f32 %v1065, %v1068
  %v1071 = vsel %vm868, %v1070, 0.0
  %1075 = vrot.lane.b32.xlu0 %v659, 64
  %v1076 = vpop.permute.xlu0 %1075
  %1077 = vrot.lane.b32.xlu0 %v660, 64
  %v1078 = vpop.permute.xlu0 %1077
  %1079 = vrot.lane.b32.xlu0 %v661, 64
  %v1080 = vpop.permute.xlu0 %1079
  %1087 = vrot.lane.b32.xlu0 %v803, 65
  %v1088 = vpop.permute.xlu0 %1087
  %1089 = vrot.lane.b32.xlu0 %v806, 65
  %v1090 = vpop.permute.xlu0 %1089
  %1091 = vrot.lane.b32.xlu0 0.0, 65
  %v1092 = vpop.permute.xlu0 %1091
  %1097 = vrot.lane.b32.xlu0 %v1071, 77
  %v1098 = vpop.permute.xlu0 %1097
  %1099 = vrot.lane.b32.xlu0 0.0, 77
  %v1100 = vpop.permute.xlu0 %1099
  %v1103 = vsel %vm167, %v534, %v1076
  %v1104 = vsel %vm167, %v535, %v1078
  %v1105 = vsel %vm167, %v536, %v1080
  %vm1106 = vcmask 531456
  %v1107 = vsel %vm1106, %v1103, %v1088
  %v1108 = vsel %vm1106, %v1104, %v1090
  %v1109 = vsel %vm1106, %v1105, %v1092
  %vm1110 = vcmask 629760
  %v1111 = vsel %vm1110, %v1107, %v1098
  %v1112 = vsel %vm1110, %v1108, %v1100
  %v1113 = vsel %vm1110, %v1109, %v1100
  %vm1114 = vcmask 637952
  %v1115 = vsel %vm1114, %v1111, 0.0
  %v1116 = vsel %vm1114, %v1112, 0.0
  %v1117 = vsel %vm1114, %v1113, 0.0
  %1118 = vst [vmem:[%s20] sm:$0xff] %v1115
  %1119 = vst [vmem:[%s20 + $0x8] sm:$0xff] %v1116
  %1120 = vst [vmem:[%s20 + $0x10] sm:$0xff] %v1117
  // Predicated region
  $region82: #{discriminator_forward.1} parent=0 // pred_check
    _
  $region83: #{discriminator_forward.1} parent=0 // pred_check_branch
    %1122 = sbr.rel (0) target = $region85
  $region84: #{discriminator_forward.1} parent=0 // pred_region
    _
  $region85: #{discriminator_forward.1} parent=0 // pred_fallthru
    _
  // Predicated region
  $region86: #{discriminator_forward.1} parent=0 // pred_check
    _
  $region87: #{discriminator_forward.1} parent=0 // pred_check_branch
    %1124 = sbr.rel (0) target = $region89
  $region88: #{discriminator_forward.1} parent=0 // pred_region
    _
  $region89: #{discriminator_forward.1} parent=0 // pred_fallthru
    _

</llo_original>
